<compile_context>
chip_gen: v7x
topology: tpu7x:2x2x1
jax: 0.10.0
libtpu: 0.0.40
codegen_flags: <defaults>
</compile_context>

<pallas_src>
from functools import partial

import jax
import jax.numpy as jnp
from jax.experimental import pallas as pl
from jax.experimental.pallas import tpu as pltpu


def _round_up(x, m):
    return ((x + m - 1) // m) * m


# ---------------------------------------------------------------------------
# Kernel 1: one LightGCN propagation layer fused with the layer-mean running sum
#   out     = G @ E                     (tiled K-reduction, f32 MXU accumulate)
#   new_sum = sum_in + G @ E            (kept in f32)
# ---------------------------------------------------------------------------
def propagate_layer_kernel(g_ref, e_ref, sum_ref, out_ref, new_sum_ref, acc_ref):
    k = pl.program_id(1)

    @pl.when(k == 0)
    def _():
        acc_ref[...] = jnp.zeros_like(acc_ref)

    acc_ref[...] += jnp.dot(g_ref[...], e_ref[...],
                            preferred_element_type=jnp.float32)

    @pl.when(k == pl.num_programs(1) - 1)
    def _():
        res = acc_ref[...]
        out_ref[...] = res.astype(out_ref.dtype)
        new_sum_ref[...] = sum_ref[...] + res


def propagate_layer(graph, emb, layer_sum, *, tile_n, out_dtype):
    Np = graph.shape[0]
    Dp = emb.shape[1]
    grid = (Np // tile_n, Np // tile_n)
    return pl.pallas_call(
        propagate_layer_kernel,
        out_shape=(jax.ShapeDtypeStruct((Np, Dp), out_dtype),      # next-layer input
                   jax.ShapeDtypeStruct((Np, Dp), jnp.float32)),   # running layer sum
        grid_spec=pltpu.PrefetchScalarGridSpec(
            num_scalar_prefetch=0,
            grid=grid,
            in_specs=[
                # adjacency tile streamed from HBM (bf16 or f32)
                pl.BlockSpec((tile_n, tile_n), lambda i, k: (i, k)),
                # embedding K-slab (lane-dense, Dp multiple of 128)
                pl.BlockSpec((tile_n, Dp), lambda i, k: (k, 0)),
                # running layer sum: constant block across K -> fetched once per row
                pl.BlockSpec((tile_n, Dp), lambda i, k: (i, 0)),
            ],
            # same output block across the K axis -> resident accumulator outputs
            out_specs=(pl.BlockSpec((tile_n, Dp), lambda i, k: (i, 0)),
                       pl.BlockSpec((tile_n, Dp), lambda i, k: (i, 0))),
            scratch_shapes=[pltpu.VMEM((tile_n, Dp), jnp.float32)],
        ),
        compiler_params=pltpu.CompilerParams(
            dimension_semantics=("parallel", "arbitrary"),
            vmem_limit_bytes=32 * 1024 * 1024,
        ),
    )(graph, emb, layer_sum)


# ---------------------------------------------------------------------------
# Propagation + layer mean:  light_out = mean_k( G^k @ E0 ), k = 0..n_layers
# ---------------------------------------------------------------------------
def lightgcn_propagate(graph, all_emb, n_layers, *, tile_n=256,
                       compute_dtype=jnp.bfloat16):
    N, D = all_emb.shape
    tile_n = _round_up(min(tile_n, N), 256)   # multiple of 256 -> (8,128)-legal tiles
    Np = _round_up(N, tile_n)                 # pad rows/cols so the grid tiles evenly
    Dp = _round_up(D, 128)                    # lane-dense latent dim

    g = jnp.zeros((Np, Np), compute_dtype).at[:N, :N].set(
        graph.astype(compute_dtype))
    e0_f32 = jnp.zeros((Np, Dp), jnp.float32).at[:N, :D].set(
        all_emb.astype(jnp.float32))

    cur = e0_f32.astype(compute_dtype)        # streamed layer input (bf16 fast path)
    layer_sum = e0_f32                        # layer-0 term of the mean, f32
    for _ in range(n_layers):                 # small static layer count
        cur, layer_sum = propagate_layer(g, cur, layer_sum,
                                         tile_n=tile_n, out_dtype=compute_dtype)
    light_out = layer_sum / float(n_layers + 1)
    return light_out[:N]                      # rows back to N; latent dim stays padded


# ---------------------------------------------------------------------------
# Kernel 2: prediction = sum_d (users_emb * items_emb), lane-dense output (1, Bpad)
# ---------------------------------------------------------------------------
def predict_kernel(u_ref, i_ref, o_ref):
    prod = u_ref[...] * i_ref[...]
    o_ref[...] = jnp.sum(prod, axis=0, keepdims=True)   # sublane reduce -> (1, Bpad)


def predict_scores(users_emb, items_emb):
    B, Dp = users_emb.shape
    Bp = _round_up(B, 128)                   # B on the lane axis, padded to lane width
    u = jnp.zeros((Dp, Bp), jnp.float32).at[:, :B].set(
        users_emb.astype(jnp.float32).T)
    it = jnp.zeros((Dp, Bp), jnp.float32).at[:, :B].set(
        items_emb.astype(jnp.float32).T)
    out = pl.pallas_call(
        predict_kernel,
        out_shape=jax.ShapeDtypeStruct((1, Bp), jnp.float32),
    )(u, it)
    return out[0, :B]


# ---------------------------------------------------------------------------
# Full forward (mirrors lightgcn.forward): computer() + gather + dot
# ---------------------------------------------------------------------------
@partial(jax.jit, static_argnames=("n_layers", "tile_n", "compute_dtype"))
def lightgcn_forward(graph, user_emb, item_emb, users, items, *, n_layers,
                     tile_n=256, compute_dtype=jnp.bfloat16):
    n_users = user_emb.shape[0]
    all_emb = jnp.concatenate([user_emb, item_emb], axis=0)      # glue
    light_out = lightgcn_propagate(graph, all_emb, n_layers,
                                   tile_n=tile_n, compute_dtype=compute_dtype)
    all_users = light_out[:n_users]
    all_items = light_out[n_users:]
    users_emb = all_users[users]                                 # glue gather
    items_emb = all_items[items]
    return predict_scores(users_emb, items_emb)                  # Pallas


# ---------------------------------------------------------------------------
# Deterministic synthetic parameter / graph construction + pure-JAX reference
# ---------------------------------------------------------------------------
def build_norm_adj(key, n_users, n_items):
    R = jax.random.bernoulli(key, p=0.15, shape=(n_users, n_items)).astype(jnp.float32)
    N = n_users + n_items
    A = jnp.zeros((N, N), jnp.float32)
    A = A.at[:n_users, n_users:].set(R)
    A = A.at[n_users:, :n_users].set(R.T)
    deg = A.sum(axis=1)
    d_inv_sqrt = jnp.where(deg > 0, 1.0 / jnp.sqrt(jnp.maximum(deg, 1e-12)), 0.0)
    return A * d_inv_sqrt[:, None] * d_inv_sqrt[None, :]


def reference_forward(graph, user_emb, item_emb, users, items, n_layers):
    n_users = user_emb.shape[0]
    all_emb = jnp.concatenate([user_emb, item_emb], axis=0)
    embs = [all_emb]
    cur = all_emb
    for _ in range(n_layers):
        cur = graph @ cur
        embs.append(cur)
    light_out = jnp.mean(jnp.stack(embs, axis=1), axis=1)
    au, ai = light_out[:n_users], light_out[n_users:]
    return (au[users] * ai[items]).sum(axis=1)


if __name__ == "__main__":
    # config: n (users), m (items), latent_dim, n_layers; dropout disabled (eval),
    # A_split=False (single dense normalized adjacency).
    n_users, n_items, latent_dim, n_layers, batch = 256, 256, 32, 3, 8
    tile_n = 256   # N = 512 -> (2, 2) grid per layer (exercises pipelined tiling)

    key = jax.random.PRNGKey(0)
    k_u, k_i, k_g, k_us, k_it = jax.random.split(key, 5)

    # nn.init.normal_(..., std=0.01)
    user_emb = (0.01 * jax.random.normal(k_u, (n_users, latent_dim))).astype(jnp.float32)
    item_emb = (0.01 * jax.random.normal(k_i, (n_items, latent_dim))).astype(jnp.float32)
    graph = build_norm_adj(k_g, n_users, n_items)

    users = jax.random.randint(k_us, (batch,), 0, n_users, dtype=jnp.int32)
    items = jax.random.randint(k_it, (batch,), 0, n_items, dtype=jnp.int32)

    ref = reference_forward(graph, user_emb, item_emb, users, items, n_layers)
    ref = jax.block_until_ready(ref)

    # 1) exactness check: f32-streamed adjacency (same semantics as the module)
    pred_f32 = lightgcn_forward(graph, user_emb, item_emb, users, items,
                                n_layers=n_layers, tile_n=tile_n,
                                compute_dtype=jnp.float32)
    pred_f32 = jax.block_until_ready(pred_f32)
    assert pred_f32.shape == (batch,)
    assert jnp.allclose(pred_f32, ref, atol=1e-5, rtol=1e-4), (pred_f32, ref)

    # 2) perf path: bf16-streamed adjacency/embeddings, f32 MXU accumulation
    pred_bf16 = lightgcn_forward(graph, user_emb, item_emb, users, items,
                                 n_layers=n_layers, tile_n=tile_n,
                                 compute_dtype=jnp.bfloat16)
    pred_bf16 = jax.block_until_ready(pred_bf16)
    assert pred_bf16.shape == (batch,)
    assert jnp.allclose(pred_bf16, ref, atol=5e-5, rtol=0.25), (pred_bf16, ref)

    print("KERNEL_OK")
</pallas_src>

<mosaic_0001>
module attributes {stable_mosaic.version = 11 : i64} {
  func.func @propagate_layer_kernel(%arg0: i32, %arg1: i32, %arg2: memref<256x256xf32, #tpu.memory_space<vmem>>, %arg3: memref<256x128xf32, #tpu.memory_space<vmem>>, %arg4: memref<256x128xf32, #tpu.memory_space<vmem>>, %arg5: memref<256x128xf32, #tpu.memory_space<vmem>>, %arg6: memref<256x128xf32, #tpu.memory_space<vmem>>, %arg7: memref<256x128xf32, #tpu.memory_space<vmem>>) attributes {dimension_semantics = [#tpu.dimension_semantics<parallel>, #tpu.dimension_semantics<arbitrary>], iteration_bounds = array<i64: 2, 2>, scalar_prefetch = 0 : i64, scratch_operands = 1 : i64, tpu.core_type = #tpu.core_type<tc>, window_params = [{transform_indices = @transform_0, window_bounds = array<i64: 256, 256>}, {transform_indices = @transform_1, window_bounds = array<i64: 256, 128>}, {transform_indices = @transform_2, window_bounds = array<i64: 256, 128>}, {transform_indices = @transform_3, window_bounds = array<i64: 256, 128>}, {transform_indices = @transform_4, window_bounds = array<i64: 256, 128>}]} {
    %c0_i32 = arith.constant 0 : i32
    %0 = arith.cmpi eq, %arg1, %c0_i32 : i32
    %1 = arith.extui %0 : i1 to i32
    %c0_i32_0 = arith.constant 0 : i32
    %2 = arith.cmpi ne, %1, %c0_i32_0 : i32
    scf.if %2 {
      %cst_9 = arith.constant 0.000000e+00 : f32
      %12 = vector.broadcast %cst_9 : f32 to vector<256x128xf32>
      %c0_10 = arith.constant 0 : index
      %c0_11 = arith.constant 0 : index
      %13 = vector.load %arg7[%c0_10, %c0_11] : memref<256x128xf32, #tpu.memory_space<vmem>>, vector<256x128xf32>
      tpu.vector_store %arg7[%c0_10, %c0_11], %12 {strides = array<i32>} : memref<256x128xf32, #tpu.memory_space<vmem>>, vector<256x128xf32>,
    } else {
    }
    %c0 = arith.constant 0 : index
    %c0_1 = arith.constant 0 : index
    %3 = vector.load %arg7[%c0, %c0_1] : memref<256x128xf32, #tpu.memory_space<vmem>>, vector<256x128xf32>
    %c0_2 = arith.constant 0 : index
    %c0_3 = arith.constant 0 : index
    %4 = vector.load %arg2[%c0_2, %c0_3] : memref<256x256xf32, #tpu.memory_space<vmem>>, vector<256x256xf32>
    %c0_4 = arith.constant 0 : index
    %c0_5 = arith.constant 0 : index
    %5 = vector.load %arg3[%c0_4, %c0_5] : memref<256x128xf32, #tpu.memory_space<vmem>>, vector<256x128xf32>
    %cst = arith.constant dense<0.000000e+00> : vector<256x128xf32>
    %6 = tpu.matmul %4, %5, %cst {dimension_numbers = #tpu.dot_dimension_numbers<[1], [0], [0], [1], [0, 0, 1, 1], [], []>} : vector<256x256xf32>, vector<256x128xf32>, vector<256x128xf32> -> vector<256x128xf32>
    %7 = arith.addf %3, %6 : vector<256x128xf32>
    %c0_6 = arith.constant 0 : index
    %c0_7 = arith.constant 0 : index
    %8 = vector.load %arg7[%c0_6, %c0_7] : memref<256x128xf32, #tpu.memory_space<vmem>>, vector<256x128xf32>
    tpu.vector_store %arg7[%c0_6, %c0_7], %7 {strides = array<i32>} : memref<256x128xf32, #tpu.memory_space<vmem>>, vector<256x128xf32>,
    %c1_i32 = arith.constant 1 : i32
    %9 = arith.cmpi eq, %arg1, %c1_i32 : i32
    %10 = arith.extui %9 : i1 to i32
    %c0_i32_8 = arith.constant 0 : i32
    %11 = arith.cmpi ne, %10, %c0_i32_8 : i32
    scf.if %11 {
      %c0_9 = arith.constant 0 : index
      %c0_10 = arith.constant 0 : index
      %12 = vector.load %arg7[%c0_9, %c0_10] : memref<256x128xf32, #tpu.memory_space<vmem>>, vector<256x128xf32>
      %c0_11 = arith.constant 0 : index
      %c0_12 = arith.constant 0 : index
      %13 = vector.load %arg5[%c0_11, %c0_12] : memref<256x128xf32, #tpu.memory_space<vmem>>, vector<256x128xf32>
      tpu.vector_store %arg5[%c0_11, %c0_12], %12 {strides = array<i32>} : memref<256x128xf32, #tpu.memory_space<vmem>>, vector<256x128xf32>,
      %c0_13 = arith.constant 0 : index
      %c0_14 = arith.constant 0 : index
      %14 = vector.load %arg4[%c0_13, %c0_14] : memref<256x128xf32, #tpu.memory_space<vmem>>, vector<256x128xf32>
      %15 = arith.addf %14, %12 : vector<256x128xf32>
      %c0_15 = arith.constant 0 : index
      %c0_16 = arith.constant 0 : index
      %16 = vector.load %arg6[%c0_15, %c0_16] : memref<256x128xf32, #tpu.memory_space<vmem>>, vector<256x128xf32>
      tpu.vector_store %arg6[%c0_15, %c0_16], %15 {strides = array<i32>} : memref<256x128xf32, #tpu.memory_space<vmem>>, vector<256x128xf32>,
    } else {
    }
    return
  }
  func.func @transform_0(%arg0: i32, %arg1: i32) -> (i32, i32) {
    %c0_i32 = arith.constant 0 : i32
    return %arg0, %arg1 : i32, i32
  }
  func.func @transform_1(%arg0: i32, %arg1: i32) -> (i32, i32) {
    %c0_i32 = arith.constant 0 : i32
    %c0_i32_0 = arith.constant 0 : i32
    return %arg1, %c0_i32 : i32, i32
  }
  func.func @transform_2(%arg0: i32, %arg1: i32) -> (i32, i32) {
    %c0_i32 = arith.constant 0 : i32
    %c0_i32_0 = arith.constant 0 : i32
    return %arg0, %c0_i32 : i32, i32
  }
  func.func @transform_3(%arg0: i32, %arg1: i32) -> (i32, i32) {
    %c0_i32 = arith.constant 0 : i32
    %c0_i32_0 = arith.constant 0 : i32
    return %arg0, %c0_i32 : i32, i32
  }
  func.func @transform_4(%arg0: i32, %arg1: i32) -> (i32, i32) {
    %c0_i32 = arith.constant 0 : i32
    %c0_i32_0 = arith.constant 0 : i32
    return %arg0, %c0_i32 : i32, i32
  }
}

module attributes {stable_mosaic.version = 11 : i64} {
  func.func @propagate_layer_kernel(%arg0: i32, %arg1: i32, %arg2: memref<256x256xf32, #tpu.memory_space<vmem>>, %arg3: memref<256x128xf32, #tpu.memory_space<vmem>>, %arg4: memref<256x128xf32, #tpu.memory_space<vmem>>, %arg5: memref<256x128xf32, #tpu.memory_space<vmem>>, %arg6: memref<256x128xf32, #tpu.memory_space<vmem>>, %arg7: memref<256x128xf32, #tpu.memory_space<vmem>>) attributes {dimension_semantics = [#tpu.dimension_semantics<parallel>, #tpu.dimension_semantics<arbitrary>], iteration_bounds = array<i64: 2, 2>, scalar_prefetch = 0 : i64, scratch_operands = 1 : i64, tpu.core_type = #tpu.core_type<tc>, window_params = [{transform_indices = @transform_0, window_bounds = array<i64: 256, 256>}, {transform_indices = @transform_1, window_bounds = array<i64: 256, 128>}, {transform_indices = @transform_2, window_bounds = array<i64: 256, 128>}, {transform_indices = @transform_3, window_bounds = array<i64: 256, 128>}, {transform_indices = @transform_4, window_bounds = array<i64: 256, 128>}]} {
    %c0_i32 = arith.constant 0 : i32
    %0 = arith.cmpi eq, %arg1, %c0_i32 : i32
    %1 = arith.extui %0 : i1 to i32
    %c0_i32_0 = arith.constant 0 : i32
    %2 = arith.cmpi ne, %1, %c0_i32_0 : i32
    scf.if %2 {
      %cst_9 = arith.constant 0.000000e+00 : f32
      %12 = vector.broadcast %cst_9 : f32 to vector<256x128xf32>
      %c0_10 = arith.constant 0 : index
      %c0_11 = arith.constant 0 : index
      %13 = vector.load %arg7[%c0_10, %c0_11] : memref<256x128xf32, #tpu.memory_space<vmem>>, vector<256x128xf32>
      tpu.vector_store %arg7[%c0_10, %c0_11], %12 {strides = array<i32>} : memref<256x128xf32, #tpu.memory_space<vmem>>, vector<256x128xf32>,
    } else {
    }
    %c0 = arith.constant 0 : index
    %c0_1 = arith.constant 0 : index
    %3 = vector.load %arg7[%c0, %c0_1] : memref<256x128xf32, #tpu.memory_space<vmem>>, vector<256x128xf32>
    %c0_2 = arith.constant 0 : index
    %c0_3 = arith.constant 0 : index
    %4 = vector.load %arg2[%c0_2, %c0_3] : memref<256x256xf32, #tpu.memory_space<vmem>>, vector<256x256xf32>
    %c0_4 = arith.constant 0 : index
    %c0_5 = arith.constant 0 : index
    %5 = vector.load %arg3[%c0_4, %c0_5] : memref<256x128xf32, #tpu.memory_space<vmem>>, vector<256x128xf32>
    %cst = arith.constant dense<0.000000e+00> : vector<256x128xf32>
    %6 = tpu.matmul %4, %5, %cst {dimension_numbers = #tpu.dot_dimension_numbers<[1], [0], [0], [1], [0, 0, 1, 1], [], []>} : vector<256x256xf32>, vector<256x128xf32>, vector<256x128xf32> -> vector<256x128xf32>
    %7 = arith.addf %3, %6 : vector<256x128xf32>
    %c0_6 = arith.constant 0 : index
    %c0_7 = arith.constant 0 : index
    %8 = vector.load %arg7[%c0_6, %c0_7] : memref<256x128xf32, #tpu.memory_space<vmem>>, vector<256x128xf32>
    tpu.vector_store %arg7[%c0_6, %c0_7], %7 {strides = array<i32>} : memref<256x128xf32, #tpu.memory_space<vmem>>, vector<256x128xf32>,
    %c1_i32 = arith.constant 1 : i32
    %9 = arith.cmpi eq, %arg1, %c1_i32 : i32
    %10 = arith.extui %9 : i1 to i32
    %c0_i32_8 = arith.constant 0 : i32
    %11 = arith.cmpi ne, %10, %c0_i32_8 : i32
    scf.if %11 {
      %c0_9 = arith.constant 0 : index
      %c0_10 = arith.constant 0 : index
      %12 = vector.load %arg7[%c0_9, %c0_10] : memref<256x128xf32, #tpu.memory_space<vmem>>, vector<256x128xf32>
      %c0_11 = arith.constant 0 : index
      %c0_12 = arith.constant 0 : index
      %13 = vector.load %arg5[%c0_11, %c0_12] : memref<256x128xf32, #tpu.memory_space<vmem>>, vector<256x128xf32>
      tpu.vector_store %arg5[%c0_11, %c0_12], %12 {strides = array<i32>} : memref<256x128xf32, #tpu.memory_space<vmem>>, vector<256x128xf32>,
      %c0_13 = arith.constant 0 : index
      %c0_14 = arith.constant 0 : index
      %14 = vector.load %arg4[%c0_13, %c0_14] : memref<256x128xf32, #tpu.memory_space<vmem>>, vector<256x128xf32>
      %15 = arith.addf %14, %12 : vector<256x128xf32>
      %c0_15 = arith.constant 0 : index
      %c0_16 = arith.constant 0 : index
      %16 = vector.load %arg6[%c0_15, %c0_16] : memref<256x128xf32, #tpu.memory_space<vmem>>, vector<256x128xf32>
      tpu.vector_store %arg6[%c0_15, %c0_16], %15 {strides = array<i32>} : memref<256x128xf32, #tpu.memory_space<vmem>>, vector<256x128xf32>,
    } else {
    }
    return
  }
  func.func @transform_0(%arg0: i32, %arg1: i32) -> (i32, i32) {
    %c0_i32 = arith.constant 0 : i32
    return %arg0, %arg1 : i32, i32
  }
  func.func @transform_1(%arg0: i32, %arg1: i32) -> (i32, i32) {
    %c0_i32 = arith.constant 0 : i32
    %c0_i32_0 = arith.constant 0 : i32
    return %arg1, %c0_i32 : i32, i32
  }
  func.func @transform_2(%arg0: i32, %arg1: i32) -> (i32, i32) {
    %c0_i32 = arith.constant 0 : i32
    %c0_i32_0 = arith.constant 0 : i32
    return %arg0, %c0_i32 : i32, i32
  }
  func.func @transform_3(%arg0: i32, %arg1: i32) -> (i32, i32) {
    %c0_i32 = arith.constant 0 : i32
    %c0_i32_0 = arith.constant 0 : i32
    return %arg0, %c0_i32 : i32, i32
  }
  func.func @transform_4(%arg0: i32, %arg1: i32) -> (i32, i32) {
    %c0_i32 = arith.constant 0 : i32
    %c0_i32_0 = arith.constant 0 : i32
    return %arg0, %c0_i32 : i32, i32
  }
}

module attributes {stable_mosaic.version = 11 : i64} {
  func.func @predict_kernel(%arg0: memref<128x128xf32, #tpu.memory_space<vmem>>, %arg1: memref<128x128xf32, #tpu.memory_space<vmem>>, %arg2: memref<1x128xf32, #tpu.memory_space<vmem>>) attributes {dimension_semantics = [], scalar_prefetch = 0 : i64, scratch_operands = 0 : i64, tpu.core_type = #tpu.core_type<tc>} {
    %c0 = arith.constant 0 : index
    %c0_0 = arith.constant 0 : index
    %0 = vector.load %arg0[%c0, %c0_0] : memref<128x128xf32, #tpu.memory_space<vmem>>, vector<128x128xf32>
    %c0_1 = arith.constant 0 : index
    %c0_2 = arith.constant 0 : index
    %1 = vector.load %arg1[%c0_1, %c0_2] : memref<128x128xf32, #tpu.memory_space<vmem>>, vector<128x128xf32>
    %2 = arith.mulf %0, %1 : vector<128x128xf32>
    %cst = arith.constant dense<0.000000e+00> : vector<128xf32>
    %3 = vector.multi_reduction <add>, %2, %cst [0] : vector<128x128xf32> to vector<128xf32>
    %4 = vector.shape_cast %3 : vector<128xf32> to vector<1x128xf32>
    %c0_3 = arith.constant 0 : index
    %c0_4 = arith.constant 0 : index
    %5 = vector.load %arg2[%c0_3, %c0_4] : memref<1x128xf32, #tpu.memory_space<vmem>>, vector<1x128xf32>
    tpu.vector_store %arg2[%c0_3, %c0_4], %4 {strides = array<i32>} : memref<1x128xf32, #tpu.memory_space<vmem>>, vector<1x128xf32>,
    return
  }
}

</mosaic_0001>

<llo_original>
// kernel: lightgcn_forward.4
$region0: #{lightgcn_forward.4}
  #allocation0 [shape = 'u32[]', space=smem, size = 0x4, offset = 0x4, fixed_abs, tag = 'smem constant byte address 0x4 - core index']
  #allocation1 [shape = 'u32[144,128]{1,0:T(1,128)}', space=vmem, size = 0x12000, scoped, tag = 'internal scratch']
  #allocation2 [shape = 'f32[256,128]{1,0:T(8,128)}', space=vmem, size = 0x20000, scoped, tag = 'scratch operand']
  %s0 = inlined_call_operand.vmem [shape: f32[512,512], index: 0, kind: input, shape index: {}]
  %s1 = inlined_call_operand.vmem [shape: f32[512,128], index: 1, kind: input, shape index: {}, may-alias: {1,2}]
  %s2 = inlined_call_operand.vmem [shape: f32[512,128], index: 2, kind: input, shape index: {}, may-alias: {1,2}]
  %s3 = inlined_call_operand.vmem [shape: f32[512,128], index: 3, kind: output, shape index: {0}]
  %s4 = inlined_call_operand.vmem [shape: f32[512,128], index: 4, kind: output, shape index: {1}]
  %5 = xla_tuple %s3, %s4
  %s6 = sld [smem:[#allocation0]]
  $region84: #{lightgcn_forward.4} parent=0
    _
  %s8 = ssub.s32 1, %s6
  %s9 = scalar_select 0, %s8, %s6
  $region1: #{lightgcn_forward.4} parent=0
    #allocation3 [shape = 'u8[524288]{0}', space=vmem, size = 0x80000, scoped, tag = 'input window, operand 0']
    loop: start=0, step=1, limit=6
    $region2: #{lightgcn_forward.4} parent=1 // loop_pre_header
      _
    $region3: #{lightgcn_forward.4} parent=1 // loop_header
      %s11 = sphi 0, %s15
      %p12 = scmp.ge.s32.totalorder %s11, 6
      %s18 = sphi 0, %s30
      %s19 = sphi 0, %s26
      %s20 = sphi 0, %s18
      %s21 = sphi 0, %s19
      %s22 = sphi 0, %s20
      %s23 = sphi 0, %s21
      %s35 = sphi 0, %s37
      %s38 = sphi 0, %s35
      %s39 = sphi 0, %s38
      %s55 = sphi 0, %s39
      %s61 = sphi 0, %s63
      %s64 = sphi 0, %s61
      %s65 = sphi 0, %s64
      %s81 = sphi 0, %s65
      %s87 = sphi 0, %s89
      %s90 = sphi 0, %s87
      %s91 = sphi 0, %s90
      %s107 = sphi 0, %s91
      %s113 = sphi 0, %s115
      %s116 = sphi 0, %s113
      %s117 = sphi 0, %s116
      %s133 = sphi 0, %s117
      %s139 = sphi 0, %s141
      %s142 = sphi 0, %s139
      %s143 = sphi 0, %s142
      %s159 = sphi 0, %s143
    $region4: #{lightgcn_forward.4} parent=1 // loop_header_branch
      %14 = sbr.rel (%p12) target = $region8
    $region5: #{lightgcn_forward.4} parent=1 // loop_body
      %s16 = ssub.s32 %s11, 1
      %s17 = ssub.s32 %s11, 2
      %s24 = sadd.s32 1, %s19
      %p25 = scmp.ge.s32.totalorder %s24, 2
      %s26 = scalar_select %p25, 0, %s24
      %s27 = sadd.s32 1, %s18
      %s28 = scalar_select %p25, %s27, %s18
      %p29 = scmp.ge.s32.totalorder %s28, 2
      %s30 = scalar_select %p29, 0, %s28
      %s31 = ssub.s32 %s18, %s30
      %s32 = ssub.s32 %s19, %s26
      %s33 = sor.u32 %s31, %s32
      %p34 = scmp.eq.s32.totalorder %s33, 0
      %s36 = sadd.s32 %s35, 1
      %s37 = scalar_select %p34, %s35, %s36
      %p40 = pneg %p34
      %p41 = scmp.eq.s32.totalorder %s11, 3
      %p42 = por %p40, %p41
      %p43 = scmp.ne.s32.totalorder %s35, %s38
      %p44 = scmp.eq.s32.totalorder %s11, 0
      %p45 = por %p43, %p44
      %p46 = scmp.ne.s32.totalorder %s35, %s38
      %p47 = scmp.eq.s32.totalorder %s16, 3
      %p48 = por %p46, %p47
      %p49 = scmp.ne.s32.totalorder %s38, %s39
      %p50 = scmp.eq.s32.totalorder %s16, 0
      %p51 = por %p49, %p50
      %p52 = scmp.ne.s32.totalorder %s38, %s39
      %p53 = scmp.eq.s32.totalorder %s17, 3
      %p54 = por %p52, %p53
      %p56 = scmp.ne.s32.totalorder %s39, %s55
      %p57 = scmp.eq.s32.totalorder %s17, 0
      %p58 = por %p56, %p57
      %s59 = ssub.s32 %s19, %s26
      %p60 = scmp.eq.s32.totalorder %s59, 0
      %s62 = sadd.s32 %s61, 1
      %s63 = scalar_select %p60, %s61, %s62
      %p66 = pneg %p60
      %p67 = scmp.eq.s32.totalorder %s11, 3
      %p68 = por %p66, %p67
      %p69 = scmp.ne.s32.totalorder %s61, %s64
      %p70 = scmp.eq.s32.totalorder %s11, 0
      %p71 = por %p69, %p70
      %p72 = scmp.ne.s32.totalorder %s61, %s64
      %p73 = scmp.eq.s32.totalorder %s16, 3
      %p74 = por %p72, %p73
      %p75 = scmp.ne.s32.totalorder %s64, %s65
      %p76 = scmp.eq.s32.totalorder %s16, 0
      %p77 = por %p75, %p76
      %p78 = scmp.ne.s32.totalorder %s64, %s65
      %p79 = scmp.eq.s32.totalorder %s17, 3
      %p80 = por %p78, %p79
      %p82 = scmp.ne.s32.totalorder %s65, %s81
      %p83 = scmp.eq.s32.totalorder %s17, 0
      %p84 = por %p82, %p83
      %s85 = ssub.s32 %s18, %s30
      %p86 = scmp.eq.s32.totalorder %s85, 0
      %s88 = sadd.s32 %s87, 1
      %s89 = scalar_select %p86, %s87, %s88
      %p92 = pneg %p86
      %p93 = scmp.eq.s32.totalorder %s11, 3
      %p94 = por %p92, %p93
      %p95 = scmp.ne.s32.totalorder %s87, %s90
      %p96 = scmp.eq.s32.totalorder %s11, 0
      %p97 = por %p95, %p96
      %p98 = scmp.ne.s32.totalorder %s87, %s90
      %p99 = scmp.eq.s32.totalorder %s16, 3
      %p100 = por %p98, %p99
      %p101 = scmp.ne.s32.totalorder %s90, %s91
      %p102 = scmp.eq.s32.totalorder %s16, 0
      %p103 = por %p101, %p102
      %p104 = scmp.ne.s32.totalorder %s90, %s91
      %p105 = scmp.eq.s32.totalorder %s17, 3
      %p106 = por %p104, %p105
      %p108 = scmp.ne.s32.totalorder %s91, %s107
      %p109 = scmp.eq.s32.totalorder %s17, 0
      %p110 = por %p108, %p109
      %s111 = ssub.s32 %s18, %s30
      %p112 = scmp.eq.s32.totalorder %s111, 0
      %s114 = sadd.s32 %s113, 1
      %s115 = scalar_select %p112, %s113, %s114
      %p118 = pneg %p112
      %p119 = scmp.eq.s32.totalorder %s11, 3
      %p120 = por %p118, %p119
      %p121 = scmp.ne.s32.totalorder %s113, %s116
      %p122 = scmp.eq.s32.totalorder %s11, 0
      %p123 = por %p121, %p122
      %p124 = scmp.ne.s32.totalorder %s113, %s116
      %p125 = scmp.eq.s32.totalorder %s16, 3
      %p126 = por %p124, %p125
      %p127 = scmp.ne.s32.totalorder %s116, %s117
      %p128 = scmp.eq.s32.totalorder %s16, 0
      %p129 = por %p127, %p128
      %p130 = scmp.ne.s32.totalorder %s116, %s117
      %p131 = scmp.eq.s32.totalorder %s17, 3
      %p132 = por %p130, %p131
      %p134 = scmp.ne.s32.totalorder %s117, %s133
      %p135 = scmp.eq.s32.totalorder %s17, 0
      %p136 = por %p134, %p135
      %s137 = ssub.s32 %s18, %s30
      %p138 = scmp.eq.s32.totalorder %s137, 0
      %s140 = sadd.s32 %s139, 1
      %s141 = scalar_select %p138, %s139, %s140
      %p144 = pneg %p138
      %p145 = scmp.eq.s32.totalorder %s11, 3
      %p146 = por %p144, %p145
      %p147 = scmp.ne.s32.totalorder %s139, %s142
      %p148 = scmp.eq.s32.totalorder %s11, 0
      %p149 = por %p147, %p148
      %p150 = scmp.ne.s32.totalorder %s139, %s142
      %p151 = scmp.eq.s32.totalorder %s16, 3
      %p152 = por %p150, %p151
      %p153 = scmp.ne.s32.totalorder %s142, %s143
      %p154 = scmp.eq.s32.totalorder %s16, 0
      %p155 = por %p153, %p154
      %p156 = scmp.ne.s32.totalorder %s142, %s143
      %p157 = scmp.eq.s32.totalorder %s17, 3
      %p158 = por %p156, %p157
      %p160 = scmp.ne.s32.totalorder %s143, %s159
      %p161 = scmp.eq.s32.totalorder %s17, 0
      %p162 = por %p160, %p161
      %p163 = scmp.le.s32.totalorder 1, %s11
      %p164 = scmp.lt.s32.totalorder %s11, 5
      %p165 = pnand %p163, %p164
      %p166 = pneg %p165
      // Predicated region
      $region9: #{lightgcn_forward.4} parent=5 // pred_check
        _
      $region10: #{lightgcn_forward.4} parent=5 // pred_check_branch
        %168 = sbr.rel (%p165) target = $region12
      $region11: #{lightgcn_forward.4} parent=5 // pred_region
        %s169 = ssub.s32 %s11, 1
      $region12: #{lightgcn_forward.4} parent=5 // pred_fallthru
        _
      %p170 = scmp.lt.s32.totalorder %s11, 4
      // Predicated region
      $region13: #{lightgcn_forward.4} parent=5 // pred_check
        %p171 = pneg %p170
      $region14: #{lightgcn_forward.4} parent=5 // pred_check_branch
        %173 = sbr.rel (%p171) target = $region16
      $region15: #{lightgcn_forward.4} parent=5 // pred_region
        // Predicated region
        $region17: #{lightgcn_forward.4} parent=15 // pred_check
          %p174 = pneg %p45
        $region18: #{lightgcn_forward.4} parent=15 // pred_check_branch
          %176 = sbr.rel (%p174) target = $region20
        $region19: #{lightgcn_forward.4} parent=15 // pred_region
          %s177 = sand.u32 %s35, 1
          %s178 = sand.u32 %s35, 1
          %s179 = smul.addr %s178, 512
          %s180 = scalar_lea.vmem [#allocation3], %s179
          %s181 = smul.u32 32, %s18
          %s182 = smul.u32 2, %s19
          %s183 = smul.addr %s181, 4
          %s184 = sadd.s32 %s182, %s183
          %s185 = smul.addr %s184, 8
          %s186 = scalar_lea.vmem %s0, %s185
          // Predicated region
          $region21: #{lightgcn_forward.4} parent=19 // pred_check
            _
          $region22: #{lightgcn_forward.4} parent=19 // pred_check_branch
            %188 = sbr.rel (0) target = $region24
          $region23: #{lightgcn_forward.4} parent=19 // pred_region
            // Predicated region
            $region25: #{lightgcn_forward.4} parent=23 // pred_check
              _
            $region26: #{lightgcn_forward.4} parent=23 // pred_check_branch
              %190 = sbr.rel (0) target = $region28
            $region27: #{lightgcn_forward.4} parent=23 // pred_region
              loop: start=0, step=1, limit=1
              $region29: #{lightgcn_forward.4} parent=27 // loop_pre_header
                _
              $region30: #{lightgcn_forward.4} parent=27 // loop_header
                %s192 = sphi 0, %s196
                %p193 = scmp.ge.s32.totalorder %s192, 1
                %s197 = sphi %s186, %s186
                %s198 = sphi %s180, %s180
              $region31: #{lightgcn_forward.4} parent=27 // loop_header_branch
                %195 = sbr.rel (%p193) target = $region35
              $region32: #{lightgcn_forward.4} parent=27 // loop_body
                %v199 = vld [vmem:[%s197] sm:$0xff]
                %200 = vst [vmem:[%s198] sm:$0xff] %v199
                %v201 = vld [vmem:[%s197 + $0x8] sm:$0xff]
                %202 = vst [vmem:[%s198 + $0x8] sm:$0xff] %v201
                %v203 = vld [vmem:[%s197 + $0x20] sm:$0xff]
                %204 = vst [vmem:[%s198 + $0x10] sm:$0xff] %v203
                %v205 = vld [vmem:[%s197 + $0x28] sm:$0xff]
                %206 = vst [vmem:[%s198 + $0x18] sm:$0xff] %v205
                %v207 = vld [vmem:[%s197 + $0x40] sm:$0xff]
                %208 = vst [vmem:[%s198 + $0x20] sm:$0xff] %v207
                %v209 = vld [vmem:[%s197 + $0x48] sm:$0xff]
                %210 = vst [vmem:[%s198 + $0x28] sm:$0xff] %v209
                %v211 = vld [vmem:[%s197 + $0x60] sm:$0xff]
                %212 = vst [vmem:[%s198 + $0x30] sm:$0xff] %v211
                %v213 = vld [vmem:[%s197 + $0x68] sm:$0xff]
                %214 = vst [vmem:[%s198 + $0x38] sm:$0xff] %v213
                %v215 = vld [vmem:[%s197 + $0x80] sm:$0xff]
                %216 = vst [vmem:[%s198 + $0x40] sm:$0xff] %v215
                %v217 = vld [vmem:[%s197 + $0x88] sm:$0xff]
                %218 = vst [vmem:[%s198 + $0x48] sm:$0xff] %v217
                %v219 = vld [vmem:[%s197 + $0xa0] sm:$0xff]
                %220 = vst [vmem:[%s198 + $0x50] sm:$0xff] %v219
                %v221 = vld [vmem:[%s197 + $0xa8] sm:$0xff]
                %222 = vst [vmem:[%s198 + $0x58] sm:$0xff] %v221
                %v223 = vld [vmem:[%s197 + $0xc0] sm:$0xff]
                %224 = vst [vmem:[%s198 + $0x60] sm:$0xff] %v223
                %v225 = vld [vmem:[%s197 + $0xc8] sm:$0xff]
                %226 = vst [vmem:[%s198 + $0x68] sm:$0xff] %v225
                %v227 = vld [vmem:[%s197 + $0xe0] sm:$0xff]
                %228 = vst [vmem:[%s198 + $0x70] sm:$0xff] %v227
                %v229 = vld [vmem:[%s197 + $0xe8] sm:$0xff]
                %230 = vst [vmem:[%s198 + $0x78] sm:$0xff] %v229
                %v231 = vld [vmem:[%s197 + $0x100] sm:$0xff]
                %232 = vst [vmem:[%s198 + $0x80] sm:$0xff] %v231
                %v233 = vld [vmem:[%s197 + $0x108] sm:$0xff]
                %234 = vst [vmem:[%s198 + $0x88] sm:$0xff] %v233
                %v235 = vld [vmem:[%s197 + $0x120] sm:$0xff]
                %236 = vst [vmem:[%s198 + $0x90] sm:$0xff] %v235
                %v237 = vld [vmem:[%s197 + $0x128] sm:$0xff]
                %238 = vst [vmem:[%s198 + $0x98] sm:$0xff] %v237
                %v239 = vld [vmem:[%s197 + $0x140] sm:$0xff]
                %240 = vst [vmem:[%s198 + $0xa0] sm:$0xff] %v239
                %v241 = vld [vmem:[%s197 + $0x148] sm:$0xff]
                %242 = vst [vmem:[%s198 + $0xa8] sm:$0xff] %v241
                %v243 = vld [vmem:[%s197 + $0x160] sm:$0xff]
                %244 = vst [vmem:[%s198 + $0xb0] sm:$0xff] %v243
                %v245 = vld [vmem:[%s197 + $0x168] sm:$0xff]
                %246 = vst [vmem:[%s198 + $0xb8] sm:$0xff] %v245
                %v247 = vld [vmem:[%s197 + $0x180] sm:$0xff]
                %248 = vst [vmem:[%s198 + $0xc0] sm:$0xff] %v247
                %v249 = vld [vmem:[%s197 + $0x188] sm:$0xff]
                %250 = vst [vmem:[%s198 + $0xc8] sm:$0xff] %v249
                %v251 = vld [vmem:[%s197 + $0x1a0] sm:$0xff]
                %252 = vst [vmem:[%s198 + $0xd0] sm:$0xff] %v251
                %v253 = vld [vmem:[%s197 + $0x1a8] sm:$0xff]
                %254 = vst [vmem:[%s198 + $0xd8] sm:$0xff] %v253
                %v255 = vld [vmem:[%s197 + $0x1c0] sm:$0xff]
                %256 = vst [vmem:[%s198 + $0xe0] sm:$0xff] %v255
                %v257 = vld [vmem:[%s197 + $0x1c8] sm:$0xff]
                %258 = vst [vmem:[%s198 + $0xe8] sm:$0xff] %v257
                %v259 = vld [vmem:[%s197 + $0x1e0] sm:$0xff]
                %260 = vst [vmem:[%s198 + $0xf0] sm:$0xff] %v259
                %v261 = vld [vmem:[%s197 + $0x1e8] sm:$0xff]
                %262 = vst [vmem:[%s198 + $0xf8] sm:$0xff] %v261
                %v263 = vld [vmem:[%s197 + $0x200] sm:$0xff]
                %264 = vst [vmem:[%s198 + $0x100] sm:$0xff] %v263
                %v265 = vld [vmem:[%s197 + $0x208] sm:$0xff]
                %266 = vst [vmem:[%s198 + $0x108] sm:$0xff] %v265
                %v267 = vld [vmem:[%s197 + $0x220] sm:$0xff]
                %268 = vst [vmem:[%s198 + $0x110] sm:$0xff] %v267
                %v269 = vld [vmem:[%s197 + $0x228] sm:$0xff]
                %270 = vst [vmem:[%s198 + $0x118] sm:$0xff] %v269
                %v271 = vld [vmem:[%s197 + $0x240] sm:$0xff]
                %272 = vst [vmem:[%s198 + $0x120] sm:$0xff] %v271
                %v273 = vld [vmem:[%s197 + $0x248] sm:$0xff]
                %274 = vst [vmem:[%s198 + $0x128] sm:$0xff] %v273
                %v275 = vld [vmem:[%s197 + $0x260] sm:$0xff]
                %276 = vst [vmem:[%s198 + $0x130] sm:$0xff] %v275
                %v277 = vld [vmem:[%s197 + $0x268] sm:$0xff]
                %278 = vst [vmem:[%s198 + $0x138] sm:$0xff] %v277
                %v279 = vld [vmem:[%s197 + $0x280] sm:$0xff]
                %280 = vst [vmem:[%s198 + $0x140] sm:$0xff] %v279
                %v281 = vld [vmem:[%s197 + $0x288] sm:$0xff]
                %282 = vst [vmem:[%s198 + $0x148] sm:$0xff] %v281
                %v283 = vld [vmem:[%s197 + $0x2a0] sm:$0xff]
                %284 = vst [vmem:[%s198 + $0x150] sm:$0xff] %v283
                %v285 = vld [vmem:[%s197 + $0x2a8] sm:$0xff]
                %286 = vst [vmem:[%s198 + $0x158] sm:$0xff] %v285
                %v287 = vld [vmem:[%s197 + $0x2c0] sm:$0xff]
                %288 = vst [vmem:[%s198 + $0x160] sm:$0xff] %v287
                %v289 = vld [vmem:[%s197 + $0x2c8] sm:$0xff]
                %290 = vst [vmem:[%s198 + $0x168] sm:$0xff] %v289
                %v291 = vld [vmem:[%s197 + $0x2e0] sm:$0xff]
                %292 = vst [vmem:[%s198 + $0x170] sm:$0xff] %v291
                %v293 = vld [vmem:[%s197 + $0x2e8] sm:$0xff]
                %294 = vst [vmem:[%s198 + $0x178] sm:$0xff] %v293
                %v295 = vld [vmem:[%s197 + $0x300] sm:$0xff]
                %296 = vst [vmem:[%s198 + $0x180] sm:$0xff] %v295
                %v297 = vld [vmem:[%s197 + $0x308] sm:$0xff]
                %298 = vst [vmem:[%s198 + $0x188] sm:$0xff] %v297
                %v299 = vld [vmem:[%s197 + $0x320] sm:$0xff]
                %300 = vst [vmem:[%s198 + $0x190] sm:$0xff] %v299
                %v301 = vld [vmem:[%s197 + $0x328] sm:$0xff]
                %302 = vst [vmem:[%s198 + $0x198] sm:$0xff] %v301
                %v303 = vld [vmem:[%s197 + $0x340] sm:$0xff]
                %304 = vst [vmem:[%s198 + $0x1a0] sm:$0xff] %v303
                %v305 = vld [vmem:[%s197 + $0x348] sm:$0xff]
                %306 = vst [vmem:[%s198 + $0x1a8] sm:$0xff] %v305
                %v307 = vld [vmem:[%s197 + $0x360] sm:$0xff]
                %308 = vst [vmem:[%s198 + $0x1b0] sm:$0xff] %v307
                %v309 = vld [vmem:[%s197 + $0x368] sm:$0xff]
                %310 = vst [vmem:[%s198 + $0x1b8] sm:$0xff] %v309
                %v311 = vld [vmem:[%s197 + $0x380] sm:$0xff]
                %312 = vst [vmem:[%s198 + $0x1c0] sm:$0xff] %v311
                %v313 = vld [vmem:[%s197 + $0x388] sm:$0xff]
                %314 = vst [vmem:[%s198 + $0x1c8] sm:$0xff] %v313
                %v315 = vld [vmem:[%s197 + $0x3a0] sm:$0xff]
                %316 = vst [vmem:[%s198 + $0x1d0] sm:$0xff] %v315
                %v317 = vld [vmem:[%s197 + $0x3a8] sm:$0xff]
                %318 = vst [vmem:[%s198 + $0x1d8] sm:$0xff] %v317
                %v319 = vld [vmem:[%s197 + $0x3c0] sm:$0xff]
                %320 = vst [vmem:[%s198 + $0x1e0] sm:$0xff] %v319
                %v321 = vld [vmem:[%s197 + $0x3c8] sm:$0xff]
                %322 = vst [vmem:[%s198 + $0x1e8] sm:$0xff] %v321
                %v323 = vld [vmem:[%s197 + $0x3e0] sm:$0xff]
                %324 = vst [vmem:[%s198 + $0x1f0] sm:$0xff] %v323
                %v325 = vld [vmem:[%s197 + $0x3e8] sm:$0xff]
                %326 = vst [vmem:[%s198 + $0x1f8] sm:$0xff] %v325
              $region33: #{lightgcn_forward.4} parent=27 // loop_footer
                %s196 = sadd.s32 1, %s192
              $region34: #{lightgcn_forward.4} parent=27 // loop_footer_branch
                %191 = sbr.rel target = $region30
              $region35: #{lightgcn_forward.4} parent=27 // loop_exit
                _
            $region28: #{lightgcn_forward.4} parent=23 // pred_fallthru
              _
            // Predicated region
            $region36: #{lightgcn_forward.4} parent=23 // pred_check
              _
            $region37: #{lightgcn_forward.4} parent=23 // pred_check_branch
              %328 = sbr.rel target = $region39
            $region38: #{lightgcn_forward.4} parent=23 // pred_region
              _
            $region39: #{lightgcn_forward.4} parent=23 // pred_fallthru
              _
          $region24: #{lightgcn_forward.4} parent=19 // pred_fallthru
            _
          %329 = vnop
        $region20: #{lightgcn_forward.4} parent=15 // pred_fallthru
          _
        // Predicated region
        $region40: #{lightgcn_forward.4} parent=15 // pred_check
          %p330 = pneg %p71
        $region41: #{lightgcn_forward.4} parent=15 // pred_check_branch
          %332 = sbr.rel (%p330) target = $region43
        $region42: #{lightgcn_forward.4} parent=15 // pred_region
          %s333 = smul.u32 32, %s19
          %p334 = scmp.lt.s32.totalorder %s333, 63
          %s335 = scalar_select %p334, %s333, 63
          %s336 = smul.addr %s335, 8
          %s337 = scalar_lea.vmem %s1, %s336
          %s338 = smul.u32 32, %s19
        $region43: #{lightgcn_forward.4} parent=15 // pred_fallthru
          _
        // Predicated region
        $region44: #{lightgcn_forward.4} parent=15 // pred_check
          %p339 = pneg %p97
        $region45: #{lightgcn_forward.4} parent=15 // pred_check_branch
          %341 = sbr.rel (%p339) target = $region47
        $region46: #{lightgcn_forward.4} parent=15 // pred_region
          %s342 = smul.u32 32, %s18
          %p343 = scmp.lt.s32.totalorder %s342, 63
          %s344 = scalar_select %p343, %s342, 63
          %s345 = smul.addr %s344, 8
          %s346 = scalar_lea.vmem %s2, %s345
          %s347 = smul.u32 32, %s18
        $region47: #{lightgcn_forward.4} parent=15 // pred_fallthru
          _
      $region16: #{lightgcn_forward.4} parent=5 // pred_fallthru
        _
      %p348 = scmp.le.s32.totalorder 1, %s11
      %p349 = scmp.lt.s32.totalorder %s11, 5
      %p350 = pnand %p348, %p349
      %p351 = pneg %p350
      // Predicated region
      $region48: #{lightgcn_forward.4} parent=5 // pred_check
        _
      $region49: #{lightgcn_forward.4} parent=5 // pred_check_branch
        %353 = sbr.rel (%p350) target = $region51
      $region50: #{lightgcn_forward.4} parent=5 // pred_region
        %s354 = ssub.s32 %s11, 1
        %s355 = sand.u32 %s38, 1
        %s356 = sand.u32 %s38, 1
        %s357 = smul.addr %s356, 512
        %s358 = scalar_lea.vmem [#allocation3], %s357
        // Predicated region
        $region52: #{lightgcn_forward.4} parent=50 // pred_check
          %p359 = pneg %p51
        $region53: #{lightgcn_forward.4} parent=50 // pred_check_branch
          %361 = sbr.rel (%p359) target = $region55
        $region54: #{lightgcn_forward.4} parent=50 // pred_region
          _
        $region55: #{lightgcn_forward.4} parent=50 // pred_fallthru
          _
        %s362 = sand.u32 %s38, 1
        %s363 = sand.u32 %s38, 1
        %s364 = smul.addr %s363, 512
        %s365 = scalar_lea.vmem [#allocation3], %s364
        %p366 = pneg %p51
        %p367 = pneg %p48
        %s368 = smul.u32 32, %s21
        %p369 = scmp.lt.s32.totalorder %s368, 63
        %s370 = scalar_select %p369, %s368, 63
        %s371 = smul.addr %s370, 8
        %s372 = scalar_lea.vmem %s1, %s371
        %p373 = pneg %p77
        %p374 = pneg %p74
        %s375 = smul.u32 32, %s20
        %p376 = scmp.lt.s32.totalorder %s375, 63
        %s377 = scalar_select %p376, %s375, 63
        %s378 = smul.addr %s377, 8
        %s379 = scalar_lea.vmem %s2, %s378
        %p380 = pneg %p103
        %p381 = pneg %p100
        %p382 = pneg %p129
        %p383 = pneg %p126
        %s384 = smul.u32 32, %s20
        %p385 = scmp.lt.s32.totalorder %s384, 63
        %s386 = scalar_select %p385, %s384, 63
        %s387 = smul.addr %s386, 8
        %s388 = scalar_lea.vmem %s3, %s387
        %p389 = pneg %p155
        %p390 = pneg %p152
        %s391 = smul.u32 32, %s20
        %p392 = scmp.lt.s32.totalorder %s391, 63
        %s393 = scalar_select %p392, %s391, 63
        %s394 = smul.addr %s393, 8
        %s395 = scalar_lea.vmem %s4, %s394
        %s396 = smul.u32 32, %s20
        %s397 = smul.u32 2, %s21
        %s398 = smul.u32 32, %s21
        %p399 = scmp.lt.s32.totalorder %s398, 63
        %s400 = scalar_select %p399, %s398, 63
        %s401 = smul.addr %s400, 8
        %s402 = scalar_lea.vmem %s1, %s401
        %s403 = smul.u32 32, %s21
        %s404 = smul.u32 32, %s20
        %p405 = scmp.lt.s32.totalorder %s404, 63
        %s406 = scalar_select %p405, %s404, 63
        %s407 = smul.addr %s406, 8
        %s408 = scalar_lea.vmem %s2, %s407
        %s409 = smul.u32 32, %s20
        %s410 = smul.u32 32, %s20
        %p411 = scmp.lt.s32.totalorder %s410, 63
        %s412 = scalar_select %p411, %s410, 63
        %s413 = smul.addr %s412, 8
        %s414 = scalar_lea.vmem %s3, %s413
        %s415 = smul.u32 32, %s20
        %s416 = smul.u32 32, %s20
        %p417 = scmp.lt.s32.totalorder %s416, 63
        %s418 = scalar_select %p417, %s416, 63
        %s419 = smul.addr %s418, 8
        %s420 = scalar_lea.vmem %s4, %s419
        %s421 = smul.u32 32, %s20
        %p422 = scmp.eq.s32.totalorder %s21, 0
        // Predicated region
        $region56: #{lightgcn_forward.4} parent=50 // pred_check
          %p423 = pneg %p422
        $region57: #{lightgcn_forward.4} parent=50 // pred_check_branch
          %425 = sbr.rel (%p423) target = $region59
        $region58: #{lightgcn_forward.4} parent=50 // pred_region
          %426 = vst [vmem:[#allocation2] sm:$0xff] 0.0
          %427 = vst [vmem:[#allocation2 + $0x8] sm:$0xff] 0.0
          %428 = vst [vmem:[#allocation2 + $0x10] sm:$0xff] 0.0
          %429 = vst [vmem:[#allocation2 + $0x18] sm:$0xff] 0.0
          %430 = vst [vmem:[#allocation2 + $0x20] sm:$0xff] 0.0
          %431 = vst [vmem:[#allocation2 + $0x28] sm:$0xff] 0.0
          %432 = vst [vmem:[#allocation2 + $0x30] sm:$0xff] 0.0
          %433 = vst [vmem:[#allocation2 + $0x38] sm:$0xff] 0.0
          %434 = vst [vmem:[#allocation2 + $0x40] sm:$0xff] 0.0
          %435 = vst [vmem:[#allocation2 + $0x48] sm:$0xff] 0.0
          %436 = vst [vmem:[#allocation2 + $0x50] sm:$0xff] 0.0
          %437 = vst [vmem:[#allocation2 + $0x58] sm:$0xff] 0.0
          %438 = vst [vmem:[#allocation2 + $0x60] sm:$0xff] 0.0
          %439 = vst [vmem:[#allocation2 + $0x68] sm:$0xff] 0.0
          %440 = vst [vmem:[#allocation2 + $0x70] sm:$0xff] 0.0
          %441 = vst [vmem:[#allocation2 + $0x78] sm:$0xff] 0.0
          %442 = vst [vmem:[#allocation2 + $0x80] sm:$0xff] 0.0
          %443 = vst [vmem:[#allocation2 + $0x88] sm:$0xff] 0.0
          %444 = vst [vmem:[#allocation2 + $0x90] sm:$0xff] 0.0
          %445 = vst [vmem:[#allocation2 + $0x98] sm:$0xff] 0.0
          %446 = vst [vmem:[#allocation2 + $0xa0] sm:$0xff] 0.0
          %447 = vst [vmem:[#allocation2 + $0xa8] sm:$0xff] 0.0
          %448 = vst [vmem:[#allocation2 + $0xb0] sm:$0xff] 0.0
          %449 = vst [vmem:[#allocation2 + $0xb8] sm:$0xff] 0.0
          %450 = vst [vmem:[#allocation2 + $0xc0] sm:$0xff] 0.0
          %451 = vst [vmem:[#allocation2 + $0xc8] sm:$0xff] 0.0
          %452 = vst [vmem:[#allocation2 + $0xd0] sm:$0xff] 0.0
          %453 = vst [vmem:[#allocation2 + $0xd8] sm:$0xff] 0.0
          %454 = vst [vmem:[#allocation2 + $0xe0] sm:$0xff] 0.0
          %455 = vst [vmem:[#allocation2 + $0xe8] sm:$0xff] 0.0
          %456 = vst [vmem:[#allocation2 + $0xf0] sm:$0xff] 0.0
          %457 = vst [vmem:[#allocation2 + $0xf8] sm:$0xff] 0.0
        $region59: #{lightgcn_forward.4} parent=50 // pred_fallthru
          _
        %v458 = vld [vmem:[#allocation2] sm:$0xff]
        %v459 = vld [vmem:[#allocation2 + $0x8] sm:$0xff]
        %v460 = vld [vmem:[#allocation2 + $0x10] sm:$0xff]
        %v461 = vld [vmem:[#allocation2 + $0x18] sm:$0xff]
        %v462 = vld [vmem:[#allocation2 + $0x20] sm:$0xff]
        %v463 = vld [vmem:[#allocation2 + $0x28] sm:$0xff]
        %v464 = vld [vmem:[#allocation2 + $0x30] sm:$0xff]
        %v465 = vld [vmem:[#allocation2 + $0x38] sm:$0xff]
        %v466 = vld [vmem:[#allocation2 + $0x40] sm:$0xff]
        %v467 = vld [vmem:[#allocation2 + $0x48] sm:$0xff]
        %v468 = vld [vmem:[#allocation2 + $0x50] sm:$0xff]
        %v469 = vld [vmem:[#allocation2 + $0x58] sm:$0xff]
        %v470 = vld [vmem:[#allocation2 + $0x60] sm:$0xff]
        %v471 = vld [vmem:[#allocation2 + $0x68] sm:$0xff]
        %v472 = vld [vmem:[#allocation2 + $0x70] sm:$0xff]
        %v473 = vld [vmem:[#allocation2 + $0x78] sm:$0xff]
        %v474 = vld [vmem:[#allocation2 + $0x80] sm:$0xff]
        %v475 = vld [vmem:[#allocation2 + $0x88] sm:$0xff]
        %v476 = vld [vmem:[#allocation2 + $0x90] sm:$0xff]
        %v477 = vld [vmem:[#allocation2 + $0x98] sm:$0xff]
        %v478 = vld [vmem:[#allocation2 + $0xa0] sm:$0xff]
        %v479 = vld [vmem:[#allocation2 + $0xa8] sm:$0xff]
        %v480 = vld [vmem:[#allocation2 + $0xb0] sm:$0xff]
        %v481 = vld [vmem:[#allocation2 + $0xb8] sm:$0xff]
        %v482 = vld [vmem:[#allocation2 + $0xc0] sm:$0xff]
        %v483 = vld [vmem:[#allocation2 + $0xc8] sm:$0xff]
        %v484 = vld [vmem:[#allocation2 + $0xd0] sm:$0xff]
        %v485 = vld [vmem:[#allocation2 + $0xd8] sm:$0xff]
        %v486 = vld [vmem:[#allocation2 + $0xe0] sm:$0xff]
        %v487 = vld [vmem:[#allocation2 + $0xe8] sm:$0xff]
        %v488 = vld [vmem:[#allocation2 + $0xf0] sm:$0xff]
        %v489 = vld [vmem:[#allocation2 + $0xf8] sm:$0xff]
        %v490 = vld [vmem:[%s358] sm:$0xff]
        %v491 = vld [vmem:[%s358 + $0x8] sm:$0xff]
        %v492 = vld [vmem:[%s358 + $0x10] sm:$0xff]
        %v493 = vld [vmem:[%s358 + $0x18] sm:$0xff]
        %v494 = vld [vmem:[%s358 + $0x20] sm:$0xff]
        %v495 = vld [vmem:[%s358 + $0x28] sm:$0xff]
        %v496 = vld [vmem:[%s358 + $0x30] sm:$0xff]
        %v497 = vld [vmem:[%s358 + $0x38] sm:$0xff]
        %v498 = vld [vmem:[%s358 + $0x40] sm:$0xff]
        %v499 = vld [vmem:[%s358 + $0x48] sm:$0xff]
        %v500 = vld [vmem:[%s358 + $0x50] sm:$0xff]
        %v501 = vld [vmem:[%s358 + $0x58] sm:$0xff]
        %v502 = vld [vmem:[%s358 + $0x60] sm:$0xff]
        %v503 = vld [vmem:[%s358 + $0x68] sm:$0xff]
        %v504 = vld [vmem:[%s358 + $0x70] sm:$0xff]
        %v505 = vld [vmem:[%s358 + $0x78] sm:$0xff]
        %v506 = vld [vmem:[%s358 + $0x80] sm:$0xff]
        %v507 = vld [vmem:[%s358 + $0x88] sm:$0xff]
        %v508 = vld [vmem:[%s358 + $0x90] sm:$0xff]
        %v509 = vld [vmem:[%s358 + $0x98] sm:$0xff]
        %v510 = vld [vmem:[%s358 + $0xa0] sm:$0xff]
        %v511 = vld [vmem:[%s358 + $0xa8] sm:$0xff]
        %v512 = vld [vmem:[%s358 + $0xb0] sm:$0xff]
        %v513 = vld [vmem:[%s358 + $0xb8] sm:$0xff]
        %v514 = vld [vmem:[%s358 + $0xc0] sm:$0xff]
        %v515 = vld [vmem:[%s358 + $0xc8] sm:$0xff]
        %v516 = vld [vmem:[%s358 + $0xd0] sm:$0xff]
        %v517 = vld [vmem:[%s358 + $0xd8] sm:$0xff]
        %v518 = vld [vmem:[%s358 + $0xe0] sm:$0xff]
        %v519 = vld [vmem:[%s358 + $0xe8] sm:$0xff]
        %v520 = vld [vmem:[%s358 + $0xf0] sm:$0xff]
        %v521 = vld [vmem:[%s358 + $0xf8] sm:$0xff]
        %v522 = vld [vmem:[%s358 + $0x100] sm:$0xff]
        %v523 = vld [vmem:[%s358 + $0x108] sm:$0xff]
        %v524 = vld [vmem:[%s358 + $0x110] sm:$0xff]
        %v525 = vld [vmem:[%s358 + $0x118] sm:$0xff]
        %v526 = vld [vmem:[%s358 + $0x120] sm:$0xff]
        %v527 = vld [vmem:[%s358 + $0x128] sm:$0xff]
        %v528 = vld [vmem:[%s358 + $0x130] sm:$0xff]
        %v529 = vld [vmem:[%s358 + $0x138] sm:$0xff]
        %v530 = vld [vmem:[%s358 + $0x140] sm:$0xff]
        %v531 = vld [vmem:[%s358 + $0x148] sm:$0xff]
        %v532 = vld [vmem:[%s358 + $0x150] sm:$0xff]
        %v533 = vld [vmem:[%s358 + $0x158] sm:$0xff]
        %v534 = vld [vmem:[%s358 + $0x160] sm:$0xff]
        %v535 = vld [vmem:[%s358 + $0x168] sm:$0xff]
        %v536 = vld [vmem:[%s358 + $0x170] sm:$0xff]
        %v537 = vld [vmem:[%s358 + $0x178] sm:$0xff]
        %v538 = vld [vmem:[%s358 + $0x180] sm:$0xff]
        %v539 = vld [vmem:[%s358 + $0x188] sm:$0xff]
        %v540 = vld [vmem:[%s358 + $0x190] sm:$0xff]
        %v541 = vld [vmem:[%s358 + $0x198] sm:$0xff]
        %v542 = vld [vmem:[%s358 + $0x1a0] sm:$0xff]
        %v543 = vld [vmem:[%s358 + $0x1a8] sm:$0xff]
        %v544 = vld [vmem:[%s358 + $0x1b0] sm:$0xff]
        %v545 = vld [vmem:[%s358 + $0x1b8] sm:$0xff]
        %v546 = vld [vmem:[%s358 + $0x1c0] sm:$0xff]
        %v547 = vld [vmem:[%s358 + $0x1c8] sm:$0xff]
        %v548 = vld [vmem:[%s358 + $0x1d0] sm:$0xff]
        %v549 = vld [vmem:[%s358 + $0x1d8] sm:$0xff]
        %v550 = vld [vmem:[%s358 + $0x1e0] sm:$0xff]
        %v551 = vld [vmem:[%s358 + $0x1e8] sm:$0xff]
        %v552 = vld [vmem:[%s358 + $0x1f0] sm:$0xff]
        %v553 = vld [vmem:[%s358 + $0x1f8] sm:$0xff]
        %v554 = vld [vmem:[%s402] sm:$0xff]
        %v555 = vld [vmem:[%s402 + $0x8] sm:$0xff]
        %v556 = vld [vmem:[%s402 + $0x10] sm:$0xff]
        %v557 = vld [vmem:[%s402 + $0x18] sm:$0xff]
        %v558 = vld [vmem:[%s402 + $0x20] sm:$0xff]
        %v559 = vld [vmem:[%s402 + $0x28] sm:$0xff]
        %v560 = vld [vmem:[%s402 + $0x30] sm:$0xff]
        %v561 = vld [vmem:[%s402 + $0x38] sm:$0xff]
        %v562 = vld [vmem:[%s402 + $0x40] sm:$0xff]
        %v563 = vld [vmem:[%s402 + $0x48] sm:$0xff]
        %v564 = vld [vmem:[%s402 + $0x50] sm:$0xff]
        %v565 = vld [vmem:[%s402 + $0x58] sm:$0xff]
        %v566 = vld [vmem:[%s402 + $0x60] sm:$0xff]
        %v567 = vld [vmem:[%s402 + $0x68] sm:$0xff]
        %v568 = vld [vmem:[%s402 + $0x70] sm:$0xff]
        %v569 = vld [vmem:[%s402 + $0x78] sm:$0xff]
        %v570 = vld [vmem:[%s402 + $0x80] sm:$0xff]
        %v571 = vld [vmem:[%s402 + $0x88] sm:$0xff]
        %v572 = vld [vmem:[%s402 + $0x90] sm:$0xff]
        %v573 = vld [vmem:[%s402 + $0x98] sm:$0xff]
        %v574 = vld [vmem:[%s402 + $0xa0] sm:$0xff]
        %v575 = vld [vmem:[%s402 + $0xa8] sm:$0xff]
        %v576 = vld [vmem:[%s402 + $0xb0] sm:$0xff]
        %v577 = vld [vmem:[%s402 + $0xb8] sm:$0xff]
        %v578 = vld [vmem:[%s402 + $0xc0] sm:$0xff]
        %v579 = vld [vmem:[%s402 + $0xc8] sm:$0xff]
        %v580 = vld [vmem:[%s402 + $0xd0] sm:$0xff]
        %v581 = vld [vmem:[%s402 + $0xd8] sm:$0xff]
        %v582 = vld [vmem:[%s402 + $0xe0] sm:$0xff]
        %v583 = vld [vmem:[%s402 + $0xe8] sm:$0xff]
        %v584 = vld [vmem:[%s402 + $0xf0] sm:$0xff]
        %v585 = vld [vmem:[%s402 + $0xf8] sm:$0xff]
        %586 = vmatprep.subr.mxu0 0.0
        %587 = vmatpush1.msra.mxu0 %v554
        %588 = vmatprep.subr.mxu0 0.0
        %589 = vmatpush1.msra.mxu0 %v555
        %590 = vmatprep.subr.mxu0 0.0
        %591 = vmatpush1.msra.mxu0 %v556
        %592 = vmatprep.subr.mxu0 0.0
        %593 = vmatpush1.msra.mxu0 %v557
        %594 = vmatprep.subr.mxu0 0.0
        %595 = vmatpush1.msra.mxu0 %v558
        %596 = vmatprep.subr.mxu0 0.0
        %597 = vmatpush1.msra.mxu0 %v559
        %598 = vmatprep.subr.mxu0 0.0
        %599 = vmatpush1.msra.mxu0 %v560
        %600 = vmatprep.subr.mxu0 0.0
        %601 = vmatpush1.msra.mxu0 %v561
        %602 = vmatprep.subr.mxu0 0.0
        %603 = vmatpush1.msra.mxu0 %v562
        %604 = vmatprep.subr.mxu0 0.0
        %605 = vmatpush1.msra.mxu0 %v563
        %606 = vmatprep.subr.mxu0 0.0
        %607 = vmatpush1.msra.mxu0 %v564
        %608 = vmatprep.subr.mxu0 0.0
        %609 = vmatpush1.msra.mxu0 %v565
        %610 = vmatprep.subr.mxu0 0.0
        %611 = vmatpush1.msra.mxu0 %v566
        %612 = vmatprep.subr.mxu0 0.0
        %613 = vmatpush1.msra.mxu0 %v567
        %614 = vmatprep.subr.mxu0 0.0
        %615 = vmatpush1.msra.mxu0 %v568
        %616 = vmatprep.subr.mxu0 0.0
        %617 = vmatpush1.msra.mxu0 %v569
        %618 = vmatprep.subr.mxu0 0.0
        %619 = vmatpush1.msra.mxu0 %v570
        %620 = vmatprep.subr.mxu0 0.0
        %621 = vmatpush1.msra.mxu0 %v571
        %622 = vmatprep.subr.mxu0 0.0
        %623 = vmatpush1.msra.mxu0 %v572
        %624 = vmatprep.subr.mxu0 0.0
        %625 = vmatpush1.msra.mxu0 %v573
        %626 = vmatprep.subr.mxu0 0.0
        %627 = vmatpush1.msra.mxu0 %v574
        %628 = vmatprep.subr.mxu0 0.0
        %629 = vmatpush1.msra.mxu0 %v575
        %630 = vmatprep.subr.mxu0 0.0
        %631 = vmatpush1.msra.mxu0 %v576
        %632 = vmatprep.subr.mxu0 0.0
        %633 = vmatpush1.msra.mxu0 %v577
        %634 = vmatprep.subr.mxu0 0.0
        %635 = vmatpush1.msra.mxu0 %v578
        %636 = vmatprep.subr.mxu0 0.0
        %637 = vmatpush1.msra.mxu0 %v579
        %638 = vmatprep.subr.mxu0 0.0
        %639 = vmatpush1.msra.mxu0 %v580
        %640 = vmatprep.subr.mxu0 0.0
        %641 = vmatpush1.msra.mxu0 %v581
        %642 = vmatprep.subr.mxu0 0.0
        %643 = vmatpush1.msra.mxu0 %v582
        %644 = vmatprep.subr.mxu0 0.0
        %645 = vmatpush1.msra.mxu0 %v583
        %646 = vmatprep.subr.mxu0 0.0
        %647 = vmatpush1.msra.mxu0 %v584
        %648 = vmatprep.subr.mxu0 0.0
        %649 = vmatpush1.msra.mxu0 %v585
        %650 = vmatprep.mubr.f32.mxu0 %v491
        %651 = vmatmul.mubr.f32.gmra.mrb[0].mxu0 %v490
        %v652 = vpop.f32.mrb[0].mxu0
        %v653 = vadd.f32 0.0, %v652
        %v654 = vpop.f32.mrb[0].mxu0
        %655 = vmatprep.mubr.f32.mxu0 %v493
        %656 = vmatmul.mubr.f32.gmra.mrb[0].mxu0 %v492
        %v657 = vpop.f32.mrb[0].mxu0
        %v658 = vadd.f32 0.0, %v657
        %v659 = vpop.f32.mrb[0].mxu0
        %660 = vmatprep.mubr.f32.mxu0 %v495
        %661 = vmatmul.mubr.f32.gmra.mrb[0].mxu0 %v494
        %v662 = vpop.f32.mrb[0].mxu0
        %v663 = vadd.f32 0.0, %v662
        %v664 = vpop.f32.mrb[0].mxu0
        %665 = vmatprep.mubr.f32.mxu0 %v497
        %666 = vmatmul.mubr.f32.gmra.mrb[0].mxu0 %v496
        %v667 = vpop.f32.mrb[0].mxu0
        %v668 = vadd.f32 0.0, %v667
        %v669 = vpop.f32.mrb[0].mxu0
        %670 = vmatprep.mubr.f32.mxu0 %v499
        %671 = vmatmul.mubr.f32.gmra.mrb[0].mxu0 %v498
        %v672 = vpop.f32.mrb[0].mxu0
        %v673 = vadd.f32 0.0, %v672
        %v674 = vpop.f32.mrb[0].mxu0
        %675 = vmatprep.mubr.f32.mxu0 %v501
        %676 = vmatmul.mubr.f32.gmra.mrb[0].mxu0 %v500
        %v677 = vpop.f32.mrb[0].mxu0
        %v678 = vadd.f32 0.0, %v677
        %v679 = vpop.f32.mrb[0].mxu0
        %680 = vmatprep.mubr.f32.mxu0 %v503
        %681 = vmatmul.mubr.f32.gmra.mrb[0].mxu0 %v502
        %v682 = vpop.f32.mrb[0].mxu0
        %v683 = vadd.f32 0.0, %v682
        %v684 = vpop.f32.mrb[0].mxu0
        %685 = vmatprep.mubr.f32.mxu0 %v505
        %686 = vmatmul.mubr.f32.gmra.mrb[0].mxu0 %v504
        %v687 = vpop.f32.mrb[0].mxu0
        %v688 = vadd.f32 0.0, %v687
        %v689 = vpop.f32.mrb[0].mxu0
        %690 = vmatprep.mubr.f32.mxu0 %v507
        %691 = vmatmul.mubr.f32.gmra.mrb[0].mxu0 %v506
        %v692 = vpop.f32.mrb[0].mxu0
        %v693 = vadd.f32 0.0, %v692
        %v694 = vpop.f32.mrb[0].mxu0
        %695 = vmatprep.mubr.f32.mxu0 %v509
        %696 = vmatmul.mubr.f32.gmra.mrb[0].mxu0 %v508
        %v697 = vpop.f32.mrb[0].mxu0
        %v698 = vadd.f32 0.0, %v697
        %v699 = vpop.f32.mrb[0].mxu0
        %700 = vmatprep.mubr.f32.mxu0 %v511
        %701 = vmatmul.mubr.f32.gmra.mrb[0].mxu0 %v510
        %v702 = vpop.f32.mrb[0].mxu0
        %v703 = vadd.f32 0.0, %v702
        %v704 = vpop.f32.mrb[0].mxu0
        %705 = vmatprep.mubr.f32.mxu0 %v513
        %706 = vmatmul.mubr.f32.gmra.mrb[0].mxu0 %v512
        %v707 = vpop.f32.mrb[0].mxu0
        %v708 = vadd.f32 0.0, %v707
        %v709 = vpop.f32.mrb[0].mxu0
        %710 = vmatprep.mubr.f32.mxu0 %v515
        %711 = vmatmul.mubr.f32.gmra.mrb[0].mxu0 %v514
        %v712 = vpop.f32.mrb[0].mxu0
        %v713 = vadd.f32 0.0, %v712
        %v714 = vpop.f32.mrb[0].mxu0
        %715 = vmatprep.mubr.f32.mxu0 %v517
        %716 = vmatmul.mubr.f32.gmra.mrb[0].mxu0 %v516
        %v717 = vpop.f32.mrb[0].mxu0
        %v718 = vadd.f32 0.0, %v717
        %v719 = vpop.f32.mrb[0].mxu0
        %720 = vmatprep.mubr.f32.mxu0 %v519
        %721 = vmatmul.mubr.f32.gmra.mrb[0].mxu0 %v518
        %v722 = vpop.f32.mrb[0].mxu0
        %v723 = vadd.f32 0.0, %v722
        %v724 = vpop.f32.mrb[0].mxu0
        %725 = vmatprep.mubr.f32.mxu0 %v521
        %726 = vmatmul.mubr.f32.gmra.mrb[0].mxu0 %v520
        %v727 = vpop.f32.mrb[0].mxu0
        %v728 = vadd.f32 0.0, %v727
        %v729 = vpop.f32.mrb[0].mxu0
        %730 = vmatprep.mubr.f32.mxu0 %v523
        %731 = vmatmul.mubr.f32.gmra.mrb[0].mxu0 %v522
        %v732 = vpop.f32.mrb[0].mxu0
        %v733 = vadd.f32 0.0, %v732
        %v734 = vpop.f32.mrb[0].mxu0
        %735 = vmatprep.mubr.f32.mxu0 %v525
        %736 = vmatmul.mubr.f32.gmra.mrb[0].mxu0 %v524
        %v737 = vpop.f32.mrb[0].mxu0
        %v738 = vadd.f32 0.0, %v737
        %v739 = vpop.f32.mrb[0].mxu0
        %740 = vmatprep.mubr.f32.mxu0 %v527
        %741 = vmatmul.mubr.f32.gmra.mrb[0].mxu0 %v526
        %v742 = vpop.f32.mrb[0].mxu0
        %v743 = vadd.f32 0.0, %v742
        %v744 = vpop.f32.mrb[0].mxu0
        %745 = vmatprep.mubr.f32.mxu0 %v529
        %746 = vmatmul.mubr.f32.gmra.mrb[0].mxu0 %v528
        %v747 = vpop.f32.mrb[0].mxu0
        %v748 = vadd.f32 0.0, %v747
        %v749 = vpop.f32.mrb[0].mxu0
        %750 = vmatprep.mubr.f32.mxu0 %v531
        %751 = vmatmul.mubr.f32.gmra.mrb[0].mxu0 %v530
        %v752 = vpop.f32.mrb[0].mxu0
        %v753 = vadd.f32 0.0, %v752
        %v754 = vpop.f32.mrb[0].mxu0
        %755 = vmatprep.mubr.f32.mxu0 %v533
        %756 = vmatmul.mubr.f32.gmra.mrb[0].mxu0 %v532
        %v757 = vpop.f32.mrb[0].mxu0
        %v758 = vadd.f32 0.0, %v757
        %v759 = vpop.f32.mrb[0].mxu0
        %760 = vmatprep.mubr.f32.mxu0 %v535
        %761 = vmatmul.mubr.f32.gmra.mrb[0].mxu0 %v534
        %v762 = vpop.f32.mrb[0].mxu0
        %v763 = vadd.f32 0.0, %v762
        %v764 = vpop.f32.mrb[0].mxu0
        %765 = vmatprep.mubr.f32.mxu0 %v537
        %766 = vmatmul.mubr.f32.gmra.mrb[0].mxu0 %v536
        %v767 = vpop.f32.mrb[0].mxu0
        %v768 = vadd.f32 0.0, %v767
        %v769 = vpop.f32.mrb[0].mxu0
        %770 = vmatprep.mubr.f32.mxu0 %v539
        %771 = vmatmul.mubr.f32.gmra.mrb[0].mxu0 %v538
        %v772 = vpop.f32.mrb[0].mxu0
        %v773 = vadd.f32 0.0, %v772
        %v774 = vpop.f32.mrb[0].mxu0
        %775 = vmatprep.mubr.f32.mxu0 %v541
        %776 = vmatmul.mubr.f32.gmra.mrb[0].mxu0 %v540
        %v777 = vpop.f32.mrb[0].mxu0
        %v778 = vadd.f32 0.0, %v777
        %v779 = vpop.f32.mrb[0].mxu0
        %780 = vmatprep.mubr.f32.mxu0 %v543
        %781 = vmatmul.mubr.f32.gmra.mrb[0].mxu0 %v542
        %v782 = vpop.f32.mrb[0].mxu0
        %v783 = vadd.f32 0.0, %v782
        %v784 = vpop.f32.mrb[0].mxu0
        %785 = vmatprep.mubr.f32.mxu0 %v545
        %786 = vmatmul.mubr.f32.gmra.mrb[0].mxu0 %v544
        %v787 = vpop.f32.mrb[0].mxu0
        %v788 = vadd.f32 0.0, %v787
        %v789 = vpop.f32.mrb[0].mxu0
        %790 = vmatprep.mubr.f32.mxu0 %v547
        %791 = vmatmul.mubr.f32.gmra.mrb[0].mxu0 %v546
        %v792 = vpop.f32.mrb[0].mxu0
        %v793 = vadd.f32 0.0, %v792
        %v794 = vpop.f32.mrb[0].mxu0
        %795 = vmatprep.mubr.f32.mxu0 %v549
        %796 = vmatmul.mubr.f32.gmra.mrb[0].mxu0 %v548
        %v797 = vpop.f32.mrb[0].mxu0
        %v798 = vadd.f32 0.0, %v797
        %v799 = vpop.f32.mrb[0].mxu0
        %800 = vmatprep.mubr.f32.mxu0 %v551
        %801 = vmatmul.mubr.f32.gmra.mrb[0].mxu0 %v550
        %v802 = vpop.f32.mrb[0].mxu0
        %v803 = vadd.f32 0.0, %v802
        %v804 = vpop.f32.mrb[0].mxu0
        %805 = vmatprep.mubr.f32.mxu0 %v553
        %806 = vmatmul.mubr.f32.gmra.mrb[0].mxu0 %v552
        %v807 = vpop.f32.mrb[0].mxu0
        %v808 = vadd.f32 0.0, %v807
        %v809 = vpop.f32.mrb[0].mxu0
        %810 = vdwg.mxu0
        %v811 = vadd.f32 %v458, %v653
        %v812 = vadd.f32 %v459, %v658
        %v813 = vadd.f32 %v460, %v663
        %v814 = vadd.f32 %v461, %v668
        %v815 = vadd.f32 %v462, %v673
        %v816 = vadd.f32 %v463, %v678
        %v817 = vadd.f32 %v464, %v683
        %v818 = vadd.f32 %v465, %v688
        %v819 = vadd.f32 %v466, %v693
        %v820 = vadd.f32 %v467, %v698
        %v821 = vadd.f32 %v468, %v703
        %v822 = vadd.f32 %v469, %v708
        %v823 = vadd.f32 %v470, %v713
        %v824 = vadd.f32 %v471, %v718
        %v825 = vadd.f32 %v472, %v723
        %v826 = vadd.f32 %v473, %v728
        %v827 = vadd.f32 %v474, %v733
        %v828 = vadd.f32 %v475, %v738
        %v829 = vadd.f32 %v476, %v743
        %v830 = vadd.f32 %v477, %v748
        %v831 = vadd.f32 %v478, %v753
        %v832 = vadd.f32 %v479, %v758
        %v833 = vadd.f32 %v480, %v763
        %v834 = vadd.f32 %v481, %v768
        %v835 = vadd.f32 %v482, %v773
        %v836 = vadd.f32 %v483, %v778
        %v837 = vadd.f32 %v484, %v783
        %v838 = vadd.f32 %v485, %v788
        %v839 = vadd.f32 %v486, %v793
        %v840 = vadd.f32 %v487, %v798
        %v841 = vadd.f32 %v488, %v803
        %v842 = vadd.f32 %v489, %v808
        %843 = vst [vmem:[#allocation2] sm:$0xff] %v811
        %844 = vst [vmem:[#allocation2 + $0x8] sm:$0xff] %v812
        %845 = vst [vmem:[#allocation2 + $0x10] sm:$0xff] %v813
        %846 = vst [vmem:[#allocation2 + $0x18] sm:$0xff] %v814
        %847 = vst [vmem:[#allocation2 + $0x20] sm:$0xff] %v815
        %848 = vst [vmem:[#allocation2 + $0x28] sm:$0xff] %v816
        %849 = vst [vmem:[#allocation2 + $0x30] sm:$0xff] %v817
        %850 = vst [vmem:[#allocation2 + $0x38] sm:$0xff] %v818
        %851 = vst [vmem:[#allocation2 + $0x40] sm:$0xff] %v819
        %852 = vst [vmem:[#allocation2 + $0x48] sm:$0xff] %v820
        %853 = vst [vmem:[#allocation2 + $0x50] sm:$0xff] %v821
        %854 = vst [vmem:[#allocation2 + $0x58] sm:$0xff] %v822
        %855 = vst [vmem:[#allocation2 + $0x60] sm:$0xff] %v823
        %856 = vst [vmem:[#allocation2 + $0x68] sm:$0xff] %v824
        %857 = vst [vmem:[#allocation2 + $0x70] sm:$0xff] %v825
        %858 = vst [vmem:[#allocation2 + $0x78] sm:$0xff] %v826
        %859 = vst [vmem:[#allocation2 + $0x80] sm:$0xff] %v827
        %860 = vst [vmem:[#allocation2 + $0x88] sm:$0xff] %v828
        %861 = vst [vmem:[#allocation2 + $0x90] sm:$0xff] %v829
        %862 = vst [vmem:[#allocation2 + $0x98] sm:$0xff] %v830
        %863 = vst [vmem:[#allocation2 + $0xa0] sm:$0xff] %v831
        %864 = vst [vmem:[#allocation2 + $0xa8] sm:$0xff] %v832
        %865 = vst [vmem:[#allocation2 + $0xb0] sm:$0xff] %v833
        %866 = vst [vmem:[#allocation2 + $0xb8] sm:$0xff] %v834
        %867 = vst [vmem:[#allocation2 + $0xc0] sm:$0xff] %v835
        %868 = vst [vmem:[#allocation2 + $0xc8] sm:$0xff] %v836
        %869 = vst [vmem:[#allocation2 + $0xd0] sm:$0xff] %v837
        %870 = vst [vmem:[#allocation2 + $0xd8] sm:$0xff] %v838
        %871 = vst [vmem:[#allocation2 + $0xe0] sm:$0xff] %v839
        %872 = vst [vmem:[#allocation2 + $0xe8] sm:$0xff] %v840
        %873 = vst [vmem:[#allocation2 + $0xf0] sm:$0xff] %v841
        %874 = vst [vmem:[#allocation2 + $0xf8] sm:$0xff] %v842
        %p875 = scmp.eq.s32.totalorder %s21, 1
        // Predicated region
        $region60: #{lightgcn_forward.4} parent=50 // pred_check
          %p876 = pneg %p875
        $region61: #{lightgcn_forward.4} parent=50 // pred_check_branch
          %878 = sbr.rel (%p876) target = $region63
        $region62: #{lightgcn_forward.4} parent=50 // pred_region
          %v879 = vld [vmem:[#allocation2] sm:$0xff]
          %v880 = vld [vmem:[#allocation2 + $0x8] sm:$0xff]
          %v881 = vld [vmem:[#allocation2 + $0x10] sm:$0xff]
          %v882 = vld [vmem:[#allocation2 + $0x18] sm:$0xff]
          %v883 = vld [vmem:[#allocation2 + $0x20] sm:$0xff]
          %v884 = vld [vmem:[#allocation2 + $0x28] sm:$0xff]
          %v885 = vld [vmem:[#allocation2 + $0x30] sm:$0xff]
          %v886 = vld [vmem:[#allocation2 + $0x38] sm:$0xff]
          %v887 = vld [vmem:[#allocation2 + $0x40] sm:$0xff]
          %v888 = vld [vmem:[#allocation2 + $0x48] sm:$0xff]
          %v889 = vld [vmem:[#allocation2 + $0x50] sm:$0xff]
          %v890 = vld [vmem:[#allocation2 + $0x58] sm:$0xff]
          %v891 = vld [vmem:[#allocation2 + $0x60] sm:$0xff]
          %v892 = vld [vmem:[#allocation2 + $0x68] sm:$0xff]
          %v893 = vld [vmem:[#allocation2 + $0x70] sm:$0xff]
          %v894 = vld [vmem:[#allocation2 + $0x78] sm:$0xff]
          %v895 = vld [vmem:[#allocation2 + $0x80] sm:$0xff]
          %v896 = vld [vmem:[#allocation2 + $0x88] sm:$0xff]
          %v897 = vld [vmem:[#allocation2 + $0x90] sm:$0xff]
          %v898 = vld [vmem:[#allocation2 + $0x98] sm:$0xff]
          %v899 = vld [vmem:[#allocation2 + $0xa0] sm:$0xff]
          %v900 = vld [vmem:[#allocation2 + $0xa8] sm:$0xff]
          %v901 = vld [vmem:[#allocation2 + $0xb0] sm:$0xff]
          %v902 = vld [vmem:[#allocation2 + $0xb8] sm:$0xff]
          %v903 = vld [vmem:[#allocation2 + $0xc0] sm:$0xff]
          %v904 = vld [vmem:[#allocation2 + $0xc8] sm:$0xff]
          %v905 = vld [vmem:[#allocation2 + $0xd0] sm:$0xff]
          %v906 = vld [vmem:[#allocation2 + $0xd8] sm:$0xff]
          %v907 = vld [vmem:[#allocation2 + $0xe0] sm:$0xff]
          %v908 = vld [vmem:[#allocation2 + $0xe8] sm:$0xff]
          %v909 = vld [vmem:[#allocation2 + $0xf0] sm:$0xff]
          %v910 = vld [vmem:[#allocation2 + $0xf8] sm:$0xff]
          %911 = vst [vmem:[%s414] sm:$0xff] %v879
          %912 = vst [vmem:[%s414 + $0x8] sm:$0xff] %v880
          %913 = vst [vmem:[%s414 + $0x10] sm:$0xff] %v881
          %914 = vst [vmem:[%s414 + $0x18] sm:$0xff] %v882
          %915 = vst [vmem:[%s414 + $0x20] sm:$0xff] %v883
          %916 = vst [vmem:[%s414 + $0x28] sm:$0xff] %v884
          %917 = vst [vmem:[%s414 + $0x30] sm:$0xff] %v885
          %918 = vst [vmem:[%s414 + $0x38] sm:$0xff] %v886
          %919 = vst [vmem:[%s414 + $0x40] sm:$0xff] %v887
          %920 = vst [vmem:[%s414 + $0x48] sm:$0xff] %v888
          %921 = vst [vmem:[%s414 + $0x50] sm:$0xff] %v889
          %922 = vst [vmem:[%s414 + $0x58] sm:$0xff] %v890
          %923 = vst [vmem:[%s414 + $0x60] sm:$0xff] %v891
          %924 = vst [vmem:[%s414 + $0x68] sm:$0xff] %v892
          %925 = vst [vmem:[%s414 + $0x70] sm:$0xff] %v893
          %926 = vst [vmem:[%s414 + $0x78] sm:$0xff] %v894
          %927 = vst [vmem:[%s414 + $0x80] sm:$0xff] %v895
          %928 = vst [vmem:[%s414 + $0x88] sm:$0xff] %v896
          %929 = vst [vmem:[%s414 + $0x90] sm:$0xff] %v897
          %930 = vst [vmem:[%s414 + $0x98] sm:$0xff] %v898
          %931 = vst [vmem:[%s414 + $0xa0] sm:$0xff] %v899
          %932 = vst [vmem:[%s414 + $0xa8] sm:$0xff] %v900
          %933 = vst [vmem:[%s414 + $0xb0] sm:$0xff] %v901
          %934 = vst [vmem:[%s414 + $0xb8] sm:$0xff] %v902
          %935 = vst [vmem:[%s414 + $0xc0] sm:$0xff] %v903
          %936 = vst [vmem:[%s414 + $0xc8] sm:$0xff] %v904
          %937 = vst [vmem:[%s414 + $0xd0] sm:$0xff] %v905
          %938 = vst [vmem:[%s414 + $0xd8] sm:$0xff] %v906
          %939 = vst [vmem:[%s414 + $0xe0] sm:$0xff] %v907
          %940 = vst [vmem:[%s414 + $0xe8] sm:$0xff] %v908
          %941 = vst [vmem:[%s414 + $0xf0] sm:$0xff] %v909
          %942 = vst [vmem:[%s414 + $0xf8] sm:$0xff] %v910
          %v943 = vld [vmem:[%s408] sm:$0xff]
          %v944 = vld [vmem:[%s408 + $0x8] sm:$0xff]
          %v945 = vld [vmem:[%s408 + $0x10] sm:$0xff]
          %v946 = vld [vmem:[%s408 + $0x18] sm:$0xff]
          %v947 = vld [vmem:[%s408 + $0x20] sm:$0xff]
          %v948 = vld [vmem:[%s408 + $0x28] sm:$0xff]
          %v949 = vld [vmem:[%s408 + $0x30] sm:$0xff]
          %v950 = vld [vmem:[%s408 + $0x38] sm:$0xff]
          %v951 = vld [vmem:[%s408 + $0x40] sm:$0xff]
          %v952 = vld [vmem:[%s408 + $0x48] sm:$0xff]
          %v953 = vld [vmem:[%s408 + $0x50] sm:$0xff]
          %v954 = vld [vmem:[%s408 + $0x58] sm:$0xff]
          %v955 = vld [vmem:[%s408 + $0x60] sm:$0xff]
          %v956 = vld [vmem:[%s408 + $0x68] sm:$0xff]
          %v957 = vld [vmem:[%s408 + $0x70] sm:$0xff]
          %v958 = vld [vmem:[%s408 + $0x78] sm:$0xff]
          %v959 = vld [vmem:[%s408 + $0x80] sm:$0xff]
          %v960 = vld [vmem:[%s408 + $0x88] sm:$0xff]
          %v961 = vld [vmem:[%s408 + $0x90] sm:$0xff]
          %v962 = vld [vmem:[%s408 + $0x98] sm:$0xff]
          %v963 = vld [vmem:[%s408 + $0xa0] sm:$0xff]
          %v964 = vld [vmem:[%s408 + $0xa8] sm:$0xff]
          %v965 = vld [vmem:[%s408 + $0xb0] sm:$0xff]
          %v966 = vld [vmem:[%s408 + $0xb8] sm:$0xff]
          %v967 = vld [vmem:[%s408 + $0xc0] sm:$0xff]
          %v968 = vld [vmem:[%s408 + $0xc8] sm:$0xff]
          %v969 = vld [vmem:[%s408 + $0xd0] sm:$0xff]
          %v970 = vld [vmem:[%s408 + $0xd8] sm:$0xff]
          %v971 = vld [vmem:[%s408 + $0xe0] sm:$0xff]
          %v972 = vld [vmem:[%s408 + $0xe8] sm:$0xff]
          %v973 = vld [vmem:[%s408 + $0xf0] sm:$0xff]
          %v974 = vld [vmem:[%s408 + $0xf8] sm:$0xff]
          %v975 = vadd.f32 %v943, %v879
          %v976 = vadd.f32 %v944, %v880
          %v977 = vadd.f32 %v945, %v881
          %v978 = vadd.f32 %v946, %v882
          %v979 = vadd.f32 %v947, %v883
          %v980 = vadd.f32 %v948, %v884
          %v981 = vadd.f32 %v949, %v885
          %v982 = vadd.f32 %v950, %v886
          %v983 = vadd.f32 %v951, %v887
          %v984 = vadd.f32 %v952, %v888
          %v985 = vadd.f32 %v953, %v889
          %v986 = vadd.f32 %v954, %v890
          %v987 = vadd.f32 %v955, %v891
          %v988 = vadd.f32 %v956, %v892
          %v989 = vadd.f32 %v957, %v893
          %v990 = vadd.f32 %v958, %v894
          %v991 = vadd.f32 %v959, %v895
          %v992 = vadd.f32 %v960, %v896
          %v993 = vadd.f32 %v961, %v897
          %v994 = vadd.f32 %v962, %v898
          %v995 = vadd.f32 %v963, %v899
          %v996 = vadd.f32 %v964, %v900
          %v997 = vadd.f32 %v965, %v901
          %v998 = vadd.f32 %v966, %v902
          %v999 = vadd.f32 %v967, %v903
          %v1000 = vadd.f32 %v968, %v904
          %v1001 = vadd.f32 %v969, %v905
          %v1002 = vadd.f32 %v970, %v906
          %v1003 = vadd.f32 %v971, %v907
          %v1004 = vadd.f32 %v972, %v908
          %v1005 = vadd.f32 %v973, %v909
          %v1006 = vadd.f32 %v974, %v910
          %1007 = vst [vmem:[%s420] sm:$0xff] %v975
          %1008 = vst [vmem:[%s420 + $0x8] sm:$0xff] %v976
          %1009 = vst [vmem:[%s420 + $0x10] sm:$0xff] %v977
          %1010 = vst [vmem:[%s420 + $0x18] sm:$0xff] %v978
          %1011 = vst [vmem:[%s420 + $0x20] sm:$0xff] %v979
          %1012 = vst [vmem:[%s420 + $0x28] sm:$0xff] %v980
          %1013 = vst [vmem:[%s420 + $0x30] sm:$0xff] %v981
          %1014 = vst [vmem:[%s420 + $0x38] sm:$0xff] %v982
          %1015 = vst [vmem:[%s420 + $0x40] sm:$0xff] %v983
          %1016 = vst [vmem:[%s420 + $0x48] sm:$0xff] %v984
          %1017 = vst [vmem:[%s420 + $0x50] sm:$0xff] %v985
          %1018 = vst [vmem:[%s420 + $0x58] sm:$0xff] %v986
          %1019 = vst [vmem:[%s420 + $0x60] sm:$0xff] %v987
          %1020 = vst [vmem:[%s420 + $0x68] sm:$0xff] %v988
          %1021 = vst [vmem:[%s420 + $0x70] sm:$0xff] %v989
          %1022 = vst [vmem:[%s420 + $0x78] sm:$0xff] %v990
          %1023 = vst [vmem:[%s420 + $0x80] sm:$0xff] %v991
          %1024 = vst [vmem:[%s420 + $0x88] sm:$0xff] %v992
          %1025 = vst [vmem:[%s420 + $0x90] sm:$0xff] %v993
          %1026 = vst [vmem:[%s420 + $0x98] sm:$0xff] %v994
          %1027 = vst [vmem:[%s420 + $0xa0] sm:$0xff] %v995
          %1028 = vst [vmem:[%s420 + $0xa8] sm:$0xff] %v996
          %1029 = vst [vmem:[%s420 + $0xb0] sm:$0xff] %v997
          %1030 = vst [vmem:[%s420 + $0xb8] sm:$0xff] %v998
          %1031 = vst [vmem:[%s420 + $0xc0] sm:$0xff] %v999
          %1032 = vst [vmem:[%s420 + $0xc8] sm:$0xff] %v1000
          %1033 = vst [vmem:[%s420 + $0xd0] sm:$0xff] %v1001
          %1034 = vst [vmem:[%s420 + $0xd8] sm:$0xff] %v1002
          %1035 = vst [vmem:[%s420 + $0xe0] sm:$0xff] %v1003
          %1036 = vst [vmem:[%s420 + $0xe8] sm:$0xff] %v1004
          %1037 = vst [vmem:[%s420 + $0xf0] sm:$0xff] %v1005
          %1038 = vst [vmem:[%s420 + $0xf8] sm:$0xff] %v1006
        $region63: #{lightgcn_forward.4} parent=50 // pred_fallthru
          _
        %s1039 = smul.u32 32, %s20
        %p1040 = scmp.lt.s32.totalorder %s1039, 63
        %s1041 = scalar_select %p1040, %s1039, 63
        %s1042 = smul.addr %s1041, 8
        %s1043 = scalar_lea.vmem %s3, %s1042
        %s1044 = smul.u32 32, %s20
        %p1045 = scmp.lt.s32.totalorder %s1044, 63
        %s1046 = scalar_select %p1045, %s1044, 63
        %s1047 = smul.addr %s1046, 8
        %s1048 = scalar_lea.vmem %s4, %s1047
        // Predicated region
        $region64: #{lightgcn_forward.4} parent=50 // pred_check
          %p1049 = pneg %p126
        $region65: #{lightgcn_forward.4} parent=50 // pred_check_branch
          %1051 = sbr.rel (%p1049) target = $region67
        $region66: #{lightgcn_forward.4} parent=50 // pred_region
          %s1052 = smul.u32 32, %s20
        $region67: #{lightgcn_forward.4} parent=50 // pred_fallthru
          _
        // Predicated region
        $region68: #{lightgcn_forward.4} parent=50 // pred_check
          %p1053 = pneg %p152
        $region69: #{lightgcn_forward.4} parent=50 // pred_check_branch
          %1055 = sbr.rel (%p1053) target = $region71
        $region70: #{lightgcn_forward.4} parent=50 // pred_region
          %s1056 = smul.u32 32, %s20
        $region71: #{lightgcn_forward.4} parent=50 // pred_fallthru
          _
      $region51: #{lightgcn_forward.4} parent=5 // pred_fallthru
        _
      %p1057 = scmp.le.s32.totalorder 2, %s11
      // Predicated region
      $region72: #{lightgcn_forward.4} parent=5 // pred_check
        %p1058 = pneg %p1057
      $region73: #{lightgcn_forward.4} parent=5 // pred_check_branch
        %1060 = sbr.rel (%p1058) target = $region75
      $region74: #{lightgcn_forward.4} parent=5 // pred_region
        %s1061 = ssub.s32 %s11, 2
        // Predicated region
        $region76: #{lightgcn_forward.4} parent=74 // pred_check
          %p1062 = pneg %p132
        $region77: #{lightgcn_forward.4} parent=74 // pred_check_branch
          %1064 = sbr.rel (%p1062) target = $region79
        $region78: #{lightgcn_forward.4} parent=74 // pred_region
          %s1065 = smul.u32 32, %s22
          %p1066 = scmp.lt.s32.totalorder %s1065, 63
          %s1067 = scalar_select %p1066, %s1065, 63
          %s1068 = smul.addr %s1067, 8
          %s1069 = scalar_lea.vmem %s3, %s1068
        $region79: #{lightgcn_forward.4} parent=74 // pred_fallthru
          _
        // Predicated region
        $region80: #{lightgcn_forward.4} parent=74 // pred_check
          %p1070 = pneg %p158
        $region81: #{lightgcn_forward.4} parent=74 // pred_check_branch
          %1072 = sbr.rel (%p1070) target = $region83
        $region82: #{lightgcn_forward.4} parent=74 // pred_region
          %s1073 = smul.u32 32, %s22
          %p1074 = scmp.lt.s32.totalorder %s1073, 63
          %s1075 = scalar_select %p1074, %s1073, 63
          %s1076 = smul.addr %s1075, 8
          %s1077 = scalar_lea.vmem %s4, %s1076
        $region83: #{lightgcn_forward.4} parent=74 // pred_fallthru
          _
      $region75: #{lightgcn_forward.4} parent=5 // pred_fallthru
        _
    $region6: #{lightgcn_forward.4} parent=1 // loop_footer
      %s15 = sadd.s32 1, %s11
    $region7: #{lightgcn_forward.4} parent=1 // loop_footer_branch
      %10 = sbr.rel target = $region3
    $region8: #{lightgcn_forward.4} parent=1 // loop_exit
      _

// kernel: lightgcn_forward.7
$region0: #{lightgcn_forward.7}
  #allocation0 [shape = 'u32[]', space=smem, size = 0x4, offset = 0x4, fixed_abs, tag = 'smem constant byte address 0x4 - core index']
  #allocation1 [shape = 'u32[144,128]{1,0:T(1,128)}', space=vmem, size = 0x12000, scoped, tag = 'internal scratch']
  %s0 = inlined_call_operand.vmem [shape: f32[128,128], index: 0, kind: input, shape index: {}]
  %s1 = inlined_call_operand.vmem [shape: f32[128,128], index: 1, kind: input, shape index: {}]
  %s2 = inlined_call_operand.vmem [shape: f32[1,128], index: 2, kind: output, shape index: {}]
  %s3 = sld [smem:[#allocation0]]
  $region18: #{lightgcn_forward.7} parent=0
    _
  %s5 = ssub.s32 1, %s3
  %s6 = scalar_select 0, %s5, %s3
  // Predicated region
  $region2: #{lightgcn_forward.7} parent=0 // pred_check
    _
  $region3: #{lightgcn_forward.7} parent=0 // pred_check_branch
    %8 = sbr.rel (0) target = $region5
  $region4: #{lightgcn_forward.7} parent=0 // pred_region
    _
  $region5: #{lightgcn_forward.7} parent=0 // pred_fallthru
    _
  // Predicated region
  $region6: #{lightgcn_forward.7} parent=0 // pred_check
    _
  $region7: #{lightgcn_forward.7} parent=0 // pred_check_branch
    %10 = sbr.rel (0) target = $region9
  $region8: #{lightgcn_forward.7} parent=0 // pred_region
    _
  $region9: #{lightgcn_forward.7} parent=0 // pred_fallthru
    _
  %v11 = vld [vmem:[%s0] sm:$0xff]
  %v12 = vld [vmem:[%s0 + $0x8] sm:$0xff]
  %v13 = vld [vmem:[%s0 + $0x10] sm:$0xff]
  %v14 = vld [vmem:[%s0 + $0x18] sm:$0xff]
  %v15 = vld [vmem:[%s0 + $0x20] sm:$0xff]
  %v16 = vld [vmem:[%s0 + $0x28] sm:$0xff]
  %v17 = vld [vmem:[%s0 + $0x30] sm:$0xff]
  %v18 = vld [vmem:[%s0 + $0x38] sm:$0xff]
  %v19 = vld [vmem:[%s0 + $0x40] sm:$0xff]
  %v20 = vld [vmem:[%s0 + $0x48] sm:$0xff]
  %v21 = vld [vmem:[%s0 + $0x50] sm:$0xff]
  %v22 = vld [vmem:[%s0 + $0x58] sm:$0xff]
  %v23 = vld [vmem:[%s0 + $0x60] sm:$0xff]
  %v24 = vld [vmem:[%s0 + $0x68] sm:$0xff]
  %v25 = vld [vmem:[%s0 + $0x70] sm:$0xff]
  %v26 = vld [vmem:[%s0 + $0x78] sm:$0xff]
  %v27 = vld [vmem:[%s1] sm:$0xff]
  %v28 = vld [vmem:[%s1 + $0x8] sm:$0xff]
  %v29 = vld [vmem:[%s1 + $0x10] sm:$0xff]
  %v30 = vld [vmem:[%s1 + $0x18] sm:$0xff]
  %v31 = vld [vmem:[%s1 + $0x20] sm:$0xff]
  %v32 = vld [vmem:[%s1 + $0x28] sm:$0xff]
  %v33 = vld [vmem:[%s1 + $0x30] sm:$0xff]
  %v34 = vld [vmem:[%s1 + $0x38] sm:$0xff]
  %v35 = vld [vmem:[%s1 + $0x40] sm:$0xff]
  %v36 = vld [vmem:[%s1 + $0x48] sm:$0xff]
  %v37 = vld [vmem:[%s1 + $0x50] sm:$0xff]
  %v38 = vld [vmem:[%s1 + $0x58] sm:$0xff]
  %v39 = vld [vmem:[%s1 + $0x60] sm:$0xff]
  %v40 = vld [vmem:[%s1 + $0x68] sm:$0xff]
  %v41 = vld [vmem:[%s1 + $0x70] sm:$0xff]
  %v42 = vld [vmem:[%s1 + $0x78] sm:$0xff]
  %v43 = vmul.f32 %v11, %v27
  %v44 = vmul.f32 %v12, %v28
  %v45 = vmul.f32 %v13, %v29
  %v46 = vmul.f32 %v14, %v30
  %v47 = vmul.f32 %v15, %v31
  %v48 = vmul.f32 %v16, %v32
  %v49 = vmul.f32 %v17, %v33
  %v50 = vmul.f32 %v18, %v34
  %v51 = vmul.f32 %v19, %v35
  %v52 = vmul.f32 %v20, %v36
  %v53 = vmul.f32 %v21, %v37
  %v54 = vmul.f32 %v22, %v38
  %v55 = vmul.f32 %v23, %v39
  %v56 = vmul.f32 %v24, %v40
  %v57 = vmul.f32 %v25, %v41
  %v58 = vmul.f32 %v26, %v42
  %v59 = vadd.f32 %v43, %v44
  %v60 = vadd.f32 %v59, %v45
  %v61 = vadd.f32 %v60, %v46
  %v62 = vadd.f32 %v61, %v47
  %v63 = vadd.f32 %v62, %v48
  %v64 = vadd.f32 %v63, %v49
  %v65 = vadd.f32 %v64, %v50
  %v66 = vadd.f32 %v65, %v51
  %v67 = vadd.f32 %v66, %v52
  %v68 = vadd.f32 %v67, %v53
  %v69 = vadd.f32 %v68, %v54
  %v70 = vadd.f32 %v69, %v55
  %v71 = vadd.f32 %v70, %v56
  %v72 = vadd.f32 %v71, %v57
  %v73 = vadd.f32 %v72, %v58
  %v74 = vrot.slane %v73, 4
  %v75 = vadd.f32 %v73, %v74
  %v76 = vrot.slane %v75, 2
  %v77 = vadd.f32 %v75, %v76
  %v78 = vrot.slane %v77, 1
  %v79 = vadd.f32 %v77, %v78
  %80 = vst [vmem:[%s2] sm:$0x1] %v79
  // Predicated region
  $region10: #{lightgcn_forward.7} parent=0 // pred_check
    _
  $region11: #{lightgcn_forward.7} parent=0 // pred_check_branch
    %82 = sbr.rel (0) target = $region13
  $region12: #{lightgcn_forward.7} parent=0 // pred_region
    _
  $region13: #{lightgcn_forward.7} parent=0 // pred_fallthru
    _
  // Predicated region
  $region14: #{lightgcn_forward.7} parent=0 // pred_check
    _
  $region15: #{lightgcn_forward.7} parent=0 // pred_check_branch
    %84 = sbr.rel (0) target = $region17
  $region16: #{lightgcn_forward.7} parent=0 // pred_region
    _
  $region17: #{lightgcn_forward.7} parent=0 // pred_fallthru
    _

// kernel: lightgcn_forward.6
$region0: #{lightgcn_forward.6}
  #allocation0 [shape = 'u32[]', space=smem, size = 0x4, offset = 0x4, fixed_abs, tag = 'smem constant byte address 0x4 - core index']
  #allocation1 [shape = 'u32[144,128]{1,0:T(1,128)}', space=vmem, size = 0x12000, scoped, tag = 'internal scratch']
  #allocation2 [shape = 'f32[256,128]{1,0:T(8,128)}', space=vmem, size = 0x20000, scoped, tag = 'scratch operand']
  %s0 = inlined_call_operand.vmem [shape: f32[512,512], index: 0, kind: input, shape index: {}]
  %s1 = inlined_call_operand.vmem [shape: f32[512,128], index: 1, kind: input, shape index: {}]
  %s2 = inlined_call_operand.vmem [shape: f32[512,128], index: 2, kind: input, shape index: {}]
  %s3 = inlined_call_operand.hbm [shape: f32[512,128], index: 3, kind: output, shape index: {0}]
  %s4 = inlined_call_operand.vmem [shape: f32[512,128], index: 4, kind: output, shape index: {1}]
  %5 = xla_tuple %s3, %s4
  %s6 = sld [smem:[#allocation0]]
  $region84: #{lightgcn_forward.6} parent=0
    _
  %s8 = ssub.s32 1, %s6
  %s9 = scalar_select 0, %s8, %s6
  $region1: #{lightgcn_forward.6} parent=0
    #allocation3 [shape = 'u8[524288]{0}', space=vmem, size = 0x80000, scoped, tag = 'input window, operand 0']
    #allocation4 [shape = 'u8[262144]{0}', space=vmem, size = 0x40000, scoped, tag = 'output window, operand 0']
    #allocation5 [shape = 's32[2]{0}', space=sflag, size = 0x8, scoped, tag = 'scoped memory for lightgcn_forward.6']
    %10 = vsyncpa [#allocation5], 0
    %s11 = scalar_lea.sflag [#allocation5], 1
    %12 = vsyncpa %s11, 0
    loop: start=0, step=1, limit=6
    $region2: #{lightgcn_forward.6} parent=1 // loop_pre_header
      _
    $region3: #{lightgcn_forward.6} parent=1 // loop_header
      %s14 = sphi 0, %s18
      %p15 = scmp.ge.s32.totalorder %s14, 6
      %s21 = sphi 0, %s33
      %s22 = sphi 0, %s29
      %s23 = sphi 0, %s21
      %s24 = sphi 0, %s22
      %s25 = sphi 0, %s23
      %s26 = sphi 0, %s24
      %s38 = sphi 0, %s40
      %s41 = sphi 0, %s38
      %s42 = sphi 0, %s41
      %s58 = sphi 0, %s42
      %s64 = sphi 0, %s66
      %s67 = sphi 0, %s64
      %s68 = sphi 0, %s67
      %s84 = sphi 0, %s68
      %s90 = sphi 0, %s92
      %s93 = sphi 0, %s90
      %s94 = sphi 0, %s93
      %s110 = sphi 0, %s94
      %s116 = sphi 0, %s118
      %s119 = sphi 0, %s116
      %s120 = sphi 0, %s119
      %s136 = sphi 0, %s120
      %s142 = sphi 0, %s144
      %s145 = sphi 0, %s142
      %s146 = sphi 0, %s145
      %s162 = sphi 0, %s146
    $region4: #{lightgcn_forward.6} parent=1 // loop_header_branch
      %17 = sbr.rel (%p15) target = $region8
    $region5: #{lightgcn_forward.6} parent=1 // loop_body
      %s19 = ssub.s32 %s14, 1
      %s20 = ssub.s32 %s14, 2
      %s27 = sadd.s32 1, %s22
      %p28 = scmp.ge.s32.totalorder %s27, 2
      %s29 = scalar_select %p28, 0, %s27
      %s30 = sadd.s32 1, %s21
      %s31 = scalar_select %p28, %s30, %s21
      %p32 = scmp.ge.s32.totalorder %s31, 2
      %s33 = scalar_select %p32, 0, %s31
      %s34 = ssub.s32 %s21, %s33
      %s35 = ssub.s32 %s22, %s29
      %s36 = sor.u32 %s34, %s35
      %p37 = scmp.eq.s32.totalorder %s36, 0
      %s39 = sadd.s32 %s38, 1
      %s40 = scalar_select %p37, %s38, %s39
      %p43 = pneg %p37
      %p44 = scmp.eq.s32.totalorder %s14, 3
      %p45 = por %p43, %p44
      %p46 = scmp.ne.s32.totalorder %s38, %s41
      %p47 = scmp.eq.s32.totalorder %s14, 0
      %p48 = por %p46, %p47
      %p49 = scmp.ne.s32.totalorder %s38, %s41
      %p50 = scmp.eq.s32.totalorder %s19, 3
      %p51 = por %p49, %p50
      %p52 = scmp.ne.s32.totalorder %s41, %s42
      %p53 = scmp.eq.s32.totalorder %s19, 0
      %p54 = por %p52, %p53
      %p55 = scmp.ne.s32.totalorder %s41, %s42
      %p56 = scmp.eq.s32.totalorder %s20, 3
      %p57 = por %p55, %p56
      %p59 = scmp.ne.s32.totalorder %s42, %s58
      %p60 = scmp.eq.s32.totalorder %s20, 0
      %p61 = por %p59, %p60
      %s62 = ssub.s32 %s22, %s29
      %p63 = scmp.eq.s32.totalorder %s62, 0
      %s65 = sadd.s32 %s64, 1
      %s66 = scalar_select %p63, %s64, %s65
      %p69 = pneg %p63
      %p70 = scmp.eq.s32.totalorder %s14, 3
      %p71 = por %p69, %p70
      %p72 = scmp.ne.s32.totalorder %s64, %s67
      %p73 = scmp.eq.s32.totalorder %s14, 0
      %p74 = por %p72, %p73
      %p75 = scmp.ne.s32.totalorder %s64, %s67
      %p76 = scmp.eq.s32.totalorder %s19, 3
      %p77 = por %p75, %p76
      %p78 = scmp.ne.s32.totalorder %s67, %s68
      %p79 = scmp.eq.s32.totalorder %s19, 0
      %p80 = por %p78, %p79
      %p81 = scmp.ne.s32.totalorder %s67, %s68
      %p82 = scmp.eq.s32.totalorder %s20, 3
      %p83 = por %p81, %p82
      %p85 = scmp.ne.s32.totalorder %s68, %s84
      %p86 = scmp.eq.s32.totalorder %s20, 0
      %p87 = por %p85, %p86
      %s88 = ssub.s32 %s21, %s33
      %p89 = scmp.eq.s32.totalorder %s88, 0
      %s91 = sadd.s32 %s90, 1
      %s92 = scalar_select %p89, %s90, %s91
      %p95 = pneg %p89
      %p96 = scmp.eq.s32.totalorder %s14, 3
      %p97 = por %p95, %p96
      %p98 = scmp.ne.s32.totalorder %s90, %s93
      %p99 = scmp.eq.s32.totalorder %s14, 0
      %p100 = por %p98, %p99
      %p101 = scmp.ne.s32.totalorder %s90, %s93
      %p102 = scmp.eq.s32.totalorder %s19, 3
      %p103 = por %p101, %p102
      %p104 = scmp.ne.s32.totalorder %s93, %s94
      %p105 = scmp.eq.s32.totalorder %s19, 0
      %p106 = por %p104, %p105
      %p107 = scmp.ne.s32.totalorder %s93, %s94
      %p108 = scmp.eq.s32.totalorder %s20, 3
      %p109 = por %p107, %p108
      %p111 = scmp.ne.s32.totalorder %s94, %s110
      %p112 = scmp.eq.s32.totalorder %s20, 0
      %p113 = por %p111, %p112
      %s114 = ssub.s32 %s21, %s33
      %p115 = scmp.eq.s32.totalorder %s114, 0
      %s117 = sadd.s32 %s116, 1
      %s118 = scalar_select %p115, %s116, %s117
      %p121 = pneg %p115
      %p122 = scmp.eq.s32.totalorder %s14, 3
      %p123 = por %p121, %p122
      %p124 = scmp.ne.s32.totalorder %s116, %s119
      %p125 = scmp.eq.s32.totalorder %s14, 0
      %p126 = por %p124, %p125
      %p127 = scmp.ne.s32.totalorder %s116, %s119
      %p128 = scmp.eq.s32.totalorder %s19, 3
      %p129 = por %p127, %p128
      %p130 = scmp.ne.s32.totalorder %s119, %s120
      %p131 = scmp.eq.s32.totalorder %s19, 0
      %p132 = por %p130, %p131
      %p133 = scmp.ne.s32.totalorder %s119, %s120
      %p134 = scmp.eq.s32.totalorder %s20, 3
      %p135 = por %p133, %p134
      %p137 = scmp.ne.s32.totalorder %s120, %s136
      %p138 = scmp.eq.s32.totalorder %s20, 0
      %p139 = por %p137, %p138
      %s140 = ssub.s32 %s21, %s33
      %p141 = scmp.eq.s32.totalorder %s140, 0
      %s143 = sadd.s32 %s142, 1
      %s144 = scalar_select %p141, %s142, %s143
      %p147 = pneg %p141
      %p148 = scmp.eq.s32.totalorder %s14, 3
      %p149 = por %p147, %p148
      %p150 = scmp.ne.s32.totalorder %s142, %s145
      %p151 = scmp.eq.s32.totalorder %s14, 0
      %p152 = por %p150, %p151
      %p153 = scmp.ne.s32.totalorder %s142, %s145
      %p154 = scmp.eq.s32.totalorder %s19, 3
      %p155 = por %p153, %p154
      %p156 = scmp.ne.s32.totalorder %s145, %s146
      %p157 = scmp.eq.s32.totalorder %s19, 0
      %p158 = por %p156, %p157
      %p159 = scmp.ne.s32.totalorder %s145, %s146
      %p160 = scmp.eq.s32.totalorder %s20, 3
      %p161 = por %p159, %p160
      %p163 = scmp.ne.s32.totalorder %s146, %s162
      %p164 = scmp.eq.s32.totalorder %s20, 0
      %p165 = por %p163, %p164
      %p166 = scmp.le.s32.totalorder 1, %s14
      %p167 = scmp.lt.s32.totalorder %s14, 5
      %p168 = pnand %p166, %p167
      %p169 = pneg %p168
      // Predicated region
      $region9: #{lightgcn_forward.6} parent=5 // pred_check
        _
      $region10: #{lightgcn_forward.6} parent=5 // pred_check_branch
        %171 = sbr.rel (%p168) target = $region12
      $region11: #{lightgcn_forward.6} parent=5 // pred_region
        %s172 = ssub.s32 %s14, 1
      $region12: #{lightgcn_forward.6} parent=5 // pred_fallthru
        _
      %p173 = scmp.lt.s32.totalorder %s14, 4
      // Predicated region
      $region13: #{lightgcn_forward.6} parent=5 // pred_check
        %p174 = pneg %p173
      $region14: #{lightgcn_forward.6} parent=5 // pred_check_branch
        %176 = sbr.rel (%p174) target = $region16
      $region15: #{lightgcn_forward.6} parent=5 // pred_region
        // Predicated region
        $region17: #{lightgcn_forward.6} parent=15 // pred_check
          %p177 = pneg %p48
        $region18: #{lightgcn_forward.6} parent=15 // pred_check_branch
          %179 = sbr.rel (%p177) target = $region20
        $region19: #{lightgcn_forward.6} parent=15 // pred_region
          %s180 = sand.u32 %s38, 1
          %s181 = sand.u32 %s38, 1
          %s182 = smul.addr %s181, 512
          %s183 = scalar_lea.vmem [#allocation3], %s182
          %s184 = smul.u32 32, %s21
          %s185 = smul.u32 2, %s22
          %s186 = smul.addr %s184, 4
          %s187 = sadd.s32 %s185, %s186
          %s188 = smul.addr %s187, 8
          %s189 = scalar_lea.vmem %s0, %s188
          // Predicated region
          $region21: #{lightgcn_forward.6} parent=19 // pred_check
            _
          $region22: #{lightgcn_forward.6} parent=19 // pred_check_branch
            %191 = sbr.rel (0) target = $region24
          $region23: #{lightgcn_forward.6} parent=19 // pred_region
            // Predicated region
            $region25: #{lightgcn_forward.6} parent=23 // pred_check
              _
            $region26: #{lightgcn_forward.6} parent=23 // pred_check_branch
              %193 = sbr.rel (0) target = $region28
            $region27: #{lightgcn_forward.6} parent=23 // pred_region
              loop: start=0, step=1, limit=1
              $region29: #{lightgcn_forward.6} parent=27 // loop_pre_header
                _
              $region30: #{lightgcn_forward.6} parent=27 // loop_header
                %s195 = sphi 0, %s199
                %p196 = scmp.ge.s32.totalorder %s195, 1
                %s200 = sphi %s189, %s189
                %s201 = sphi %s183, %s183
              $region31: #{lightgcn_forward.6} parent=27 // loop_header_branch
                %198 = sbr.rel (%p196) target = $region35
              $region32: #{lightgcn_forward.6} parent=27 // loop_body
                %v202 = vld [vmem:[%s200] sm:$0xff]
                %203 = vst [vmem:[%s201] sm:$0xff] %v202
                %v204 = vld [vmem:[%s200 + $0x8] sm:$0xff]
                %205 = vst [vmem:[%s201 + $0x8] sm:$0xff] %v204
                %v206 = vld [vmem:[%s200 + $0x20] sm:$0xff]
                %207 = vst [vmem:[%s201 + $0x10] sm:$0xff] %v206
                %v208 = vld [vmem:[%s200 + $0x28] sm:$0xff]
                %209 = vst [vmem:[%s201 + $0x18] sm:$0xff] %v208
                %v210 = vld [vmem:[%s200 + $0x40] sm:$0xff]
                %211 = vst [vmem:[%s201 + $0x20] sm:$0xff] %v210
                %v212 = vld [vmem:[%s200 + $0x48] sm:$0xff]
                %213 = vst [vmem:[%s201 + $0x28] sm:$0xff] %v212
                %v214 = vld [vmem:[%s200 + $0x60] sm:$0xff]
                %215 = vst [vmem:[%s201 + $0x30] sm:$0xff] %v214
                %v216 = vld [vmem:[%s200 + $0x68] sm:$0xff]
                %217 = vst [vmem:[%s201 + $0x38] sm:$0xff] %v216
                %v218 = vld [vmem:[%s200 + $0x80] sm:$0xff]
                %219 = vst [vmem:[%s201 + $0x40] sm:$0xff] %v218
                %v220 = vld [vmem:[%s200 + $0x88] sm:$0xff]
                %221 = vst [vmem:[%s201 + $0x48] sm:$0xff] %v220
                %v222 = vld [vmem:[%s200 + $0xa0] sm:$0xff]
                %223 = vst [vmem:[%s201 + $0x50] sm:$0xff] %v222
                %v224 = vld [vmem:[%s200 + $0xa8] sm:$0xff]
                %225 = vst [vmem:[%s201 + $0x58] sm:$0xff] %v224
                %v226 = vld [vmem:[%s200 + $0xc0] sm:$0xff]
                %227 = vst [vmem:[%s201 + $0x60] sm:$0xff] %v226
                %v228 = vld [vmem:[%s200 + $0xc8] sm:$0xff]
                %229 = vst [vmem:[%s201 + $0x68] sm:$0xff] %v228
                %v230 = vld [vmem:[%s200 + $0xe0] sm:$0xff]
                %231 = vst [vmem:[%s201 + $0x70] sm:$0xff] %v230
                %v232 = vld [vmem:[%s200 + $0xe8] sm:$0xff]
                %233 = vst [vmem:[%s201 + $0x78] sm:$0xff] %v232
                %v234 = vld [vmem:[%s200 + $0x100] sm:$0xff]
                %235 = vst [vmem:[%s201 + $0x80] sm:$0xff] %v234
                %v236 = vld [vmem:[%s200 + $0x108] sm:$0xff]
                %237 = vst [vmem:[%s201 + $0x88] sm:$0xff] %v236
                %v238 = vld [vmem:[%s200 + $0x120] sm:$0xff]
                %239 = vst [vmem:[%s201 + $0x90] sm:$0xff] %v238
                %v240 = vld [vmem:[%s200 + $0x128] sm:$0xff]
                %241 = vst [vmem:[%s201 + $0x98] sm:$0xff] %v240
                %v242 = vld [vmem:[%s200 + $0x140] sm:$0xff]
                %243 = vst [vmem:[%s201 + $0xa0] sm:$0xff] %v242
                %v244 = vld [vmem:[%s200 + $0x148] sm:$0xff]
                %245 = vst [vmem:[%s201 + $0xa8] sm:$0xff] %v244
                %v246 = vld [vmem:[%s200 + $0x160] sm:$0xff]
                %247 = vst [vmem:[%s201 + $0xb0] sm:$0xff] %v246
                %v248 = vld [vmem:[%s200 + $0x168] sm:$0xff]
                %249 = vst [vmem:[%s201 + $0xb8] sm:$0xff] %v248
                %v250 = vld [vmem:[%s200 + $0x180] sm:$0xff]
                %251 = vst [vmem:[%s201 + $0xc0] sm:$0xff] %v250
                %v252 = vld [vmem:[%s200 + $0x188] sm:$0xff]
                %253 = vst [vmem:[%s201 + $0xc8] sm:$0xff] %v252
                %v254 = vld [vmem:[%s200 + $0x1a0] sm:$0xff]
                %255 = vst [vmem:[%s201 + $0xd0] sm:$0xff] %v254
                %v256 = vld [vmem:[%s200 + $0x1a8] sm:$0xff]
                %257 = vst [vmem:[%s201 + $0xd8] sm:$0xff] %v256
                %v258 = vld [vmem:[%s200 + $0x1c0] sm:$0xff]
                %259 = vst [vmem:[%s201 + $0xe0] sm:$0xff] %v258
                %v260 = vld [vmem:[%s200 + $0x1c8] sm:$0xff]
                %261 = vst [vmem:[%s201 + $0xe8] sm:$0xff] %v260
                %v262 = vld [vmem:[%s200 + $0x1e0] sm:$0xff]
                %263 = vst [vmem:[%s201 + $0xf0] sm:$0xff] %v262
                %v264 = vld [vmem:[%s200 + $0x1e8] sm:$0xff]
                %265 = vst [vmem:[%s201 + $0xf8] sm:$0xff] %v264
                %v266 = vld [vmem:[%s200 + $0x200] sm:$0xff]
                %267 = vst [vmem:[%s201 + $0x100] sm:$0xff] %v266
                %v268 = vld [vmem:[%s200 + $0x208] sm:$0xff]
                %269 = vst [vmem:[%s201 + $0x108] sm:$0xff] %v268
                %v270 = vld [vmem:[%s200 + $0x220] sm:$0xff]
                %271 = vst [vmem:[%s201 + $0x110] sm:$0xff] %v270
                %v272 = vld [vmem:[%s200 + $0x228] sm:$0xff]
                %273 = vst [vmem:[%s201 + $0x118] sm:$0xff] %v272
                %v274 = vld [vmem:[%s200 + $0x240] sm:$0xff]
                %275 = vst [vmem:[%s201 + $0x120] sm:$0xff] %v274
                %v276 = vld [vmem:[%s200 + $0x248] sm:$0xff]
                %277 = vst [vmem:[%s201 + $0x128] sm:$0xff] %v276
                %v278 = vld [vmem:[%s200 + $0x260] sm:$0xff]
                %279 = vst [vmem:[%s201 + $0x130] sm:$0xff] %v278
                %v280 = vld [vmem:[%s200 + $0x268] sm:$0xff]
                %281 = vst [vmem:[%s201 + $0x138] sm:$0xff] %v280
                %v282 = vld [vmem:[%s200 + $0x280] sm:$0xff]
                %283 = vst [vmem:[%s201 + $0x140] sm:$0xff] %v282
                %v284 = vld [vmem:[%s200 + $0x288] sm:$0xff]
                %285 = vst [vmem:[%s201 + $0x148] sm:$0xff] %v284
                %v286 = vld [vmem:[%s200 + $0x2a0] sm:$0xff]
                %287 = vst [vmem:[%s201 + $0x150] sm:$0xff] %v286
                %v288 = vld [vmem:[%s200 + $0x2a8] sm:$0xff]
                %289 = vst [vmem:[%s201 + $0x158] sm:$0xff] %v288
                %v290 = vld [vmem:[%s200 + $0x2c0] sm:$0xff]
                %291 = vst [vmem:[%s201 + $0x160] sm:$0xff] %v290
                %v292 = vld [vmem:[%s200 + $0x2c8] sm:$0xff]
                %293 = vst [vmem:[%s201 + $0x168] sm:$0xff] %v292
                %v294 = vld [vmem:[%s200 + $0x2e0] sm:$0xff]
                %295 = vst [vmem:[%s201 + $0x170] sm:$0xff] %v294
                %v296 = vld [vmem:[%s200 + $0x2e8] sm:$0xff]
                %297 = vst [vmem:[%s201 + $0x178] sm:$0xff] %v296
                %v298 = vld [vmem:[%s200 + $0x300] sm:$0xff]
                %299 = vst [vmem:[%s201 + $0x180] sm:$0xff] %v298
                %v300 = vld [vmem:[%s200 + $0x308] sm:$0xff]
                %301 = vst [vmem:[%s201 + $0x188] sm:$0xff] %v300
                %v302 = vld [vmem:[%s200 + $0x320] sm:$0xff]
                %303 = vst [vmem:[%s201 + $0x190] sm:$0xff] %v302
                %v304 = vld [vmem:[%s200 + $0x328] sm:$0xff]
                %305 = vst [vmem:[%s201 + $0x198] sm:$0xff] %v304
                %v306 = vld [vmem:[%s200 + $0x340] sm:$0xff]
                %307 = vst [vmem:[%s201 + $0x1a0] sm:$0xff] %v306
                %v308 = vld [vmem:[%s200 + $0x348] sm:$0xff]
                %309 = vst [vmem:[%s201 + $0x1a8] sm:$0xff] %v308
                %v310 = vld [vmem:[%s200 + $0x360] sm:$0xff]
                %311 = vst [vmem:[%s201 + $0x1b0] sm:$0xff] %v310
                %v312 = vld [vmem:[%s200 + $0x368] sm:$0xff]
                %313 = vst [vmem:[%s201 + $0x1b8] sm:$0xff] %v312
                %v314 = vld [vmem:[%s200 + $0x380] sm:$0xff]
                %315 = vst [vmem:[%s201 + $0x1c0] sm:$0xff] %v314
                %v316 = vld [vmem:[%s200 + $0x388] sm:$0xff]
                %317 = vst [vmem:[%s201 + $0x1c8] sm:$0xff] %v316
                %v318 = vld [vmem:[%s200 + $0x3a0] sm:$0xff]
                %319 = vst [vmem:[%s201 + $0x1d0] sm:$0xff] %v318
                %v320 = vld [vmem:[%s200 + $0x3a8] sm:$0xff]
                %321 = vst [vmem:[%s201 + $0x1d8] sm:$0xff] %v320
                %v322 = vld [vmem:[%s200 + $0x3c0] sm:$0xff]
                %323 = vst [vmem:[%s201 + $0x1e0] sm:$0xff] %v322
                %v324 = vld [vmem:[%s200 + $0x3c8] sm:$0xff]
                %325 = vst [vmem:[%s201 + $0x1e8] sm:$0xff] %v324
                %v326 = vld [vmem:[%s200 + $0x3e0] sm:$0xff]
                %327 = vst [vmem:[%s201 + $0x1f0] sm:$0xff] %v326
                %v328 = vld [vmem:[%s200 + $0x3e8] sm:$0xff]
                %329 = vst [vmem:[%s201 + $0x1f8] sm:$0xff] %v328
              $region33: #{lightgcn_forward.6} parent=27 // loop_footer
                %s199 = sadd.s32 1, %s195
              $region34: #{lightgcn_forward.6} parent=27 // loop_footer_branch
                %194 = sbr.rel target = $region30
              $region35: #{lightgcn_forward.6} parent=27 // loop_exit
                _
            $region28: #{lightgcn_forward.6} parent=23 // pred_fallthru
              _
            // Predicated region
            $region36: #{lightgcn_forward.6} parent=23 // pred_check
              _
            $region37: #{lightgcn_forward.6} parent=23 // pred_check_branch
              %331 = sbr.rel target = $region39
            $region38: #{lightgcn_forward.6} parent=23 // pred_region
              _
            $region39: #{lightgcn_forward.6} parent=23 // pred_fallthru
              _
          $region24: #{lightgcn_forward.6} parent=19 // pred_fallthru
            _
          %332 = vnop
        $region20: #{lightgcn_forward.6} parent=15 // pred_fallthru
          _
        // Predicated region
        $region40: #{lightgcn_forward.6} parent=15 // pred_check
          %p333 = pneg %p74
        $region41: #{lightgcn_forward.6} parent=15 // pred_check_branch
          %335 = sbr.rel (%p333) target = $region43
        $region42: #{lightgcn_forward.6} parent=15 // pred_region
          %s336 = smul.u32 32, %s22
          %p337 = scmp.lt.s32.totalorder %s336, 63
          %s338 = scalar_select %p337, %s336, 63
          %s339 = smul.addr %s338, 8
          %s340 = scalar_lea.vmem %s1, %s339
          %s341 = smul.u32 32, %s22
        $region43: #{lightgcn_forward.6} parent=15 // pred_fallthru
          _
        // Predicated region
        $region44: #{lightgcn_forward.6} parent=15 // pred_check
          %p342 = pneg %p100
        $region45: #{lightgcn_forward.6} parent=15 // pred_check_branch
          %344 = sbr.rel (%p342) target = $region47
        $region46: #{lightgcn_forward.6} parent=15 // pred_region
          %s345 = smul.u32 32, %s21
          %p346 = scmp.lt.s32.totalorder %s345, 63
          %s347 = scalar_select %p346, %s345, 63
          %s348 = smul.addr %s347, 8
          %s349 = scalar_lea.vmem %s2, %s348
          %s350 = smul.u32 32, %s21
        $region47: #{lightgcn_forward.6} parent=15 // pred_fallthru
          _
      $region16: #{lightgcn_forward.6} parent=5 // pred_fallthru
        _
      %p351 = scmp.le.s32.totalorder 1, %s14
      %p352 = scmp.lt.s32.totalorder %s14, 5
      %p353 = pnand %p351, %p352
      %p354 = pneg %p353
      // Predicated region
      $region48: #{lightgcn_forward.6} parent=5 // pred_check
        _
      $region49: #{lightgcn_forward.6} parent=5 // pred_check_branch
        %356 = sbr.rel (%p353) target = $region51
      $region50: #{lightgcn_forward.6} parent=5 // pred_region
        %s357 = ssub.s32 %s14, 1
        %s358 = sand.u32 %s41, 1
        %s359 = sand.u32 %s41, 1
        %s360 = smul.addr %s359, 512
        %s361 = scalar_lea.vmem [#allocation3], %s360
        // Predicated region
        $region52: #{lightgcn_forward.6} parent=50 // pred_check
          %p362 = pneg %p54
        $region53: #{lightgcn_forward.6} parent=50 // pred_check_branch
          %364 = sbr.rel (%p362) target = $region55
        $region54: #{lightgcn_forward.6} parent=50 // pred_region
          _
        $region55: #{lightgcn_forward.6} parent=50 // pred_fallthru
          _
        %s365 = sand.u32 %s41, 1
        %s366 = sand.u32 %s41, 1
        %s367 = smul.addr %s366, 512
        %s368 = scalar_lea.vmem [#allocation3], %s367
        %p369 = pneg %p54
        %p370 = pneg %p51
        %s371 = smul.u32 32, %s24
        %p372 = scmp.lt.s32.totalorder %s371, 63
        %s373 = scalar_select %p372, %s371, 63
        %s374 = smul.addr %s373, 8
        %s375 = scalar_lea.vmem %s1, %s374
        %p376 = pneg %p80
        %p377 = pneg %p77
        %s378 = smul.u32 32, %s23
        %p379 = scmp.lt.s32.totalorder %s378, 63
        %s380 = scalar_select %p379, %s378, 63
        %s381 = smul.addr %s380, 8
        %s382 = scalar_lea.vmem %s2, %s381
        %p383 = pneg %p106
        %p384 = pneg %p103
        %p385 = pneg %p132
        %p386 = pneg %p129
        %s387 = sand.u32 %s119, 1
        %s388 = scalar_lea.sflag [#allocation5], %s387
        %s389 = sand.u32 %s119, 1
        %s390 = smul.addr %s389, 256
        %s391 = scalar_lea.vmem [#allocation4], %s390
        %p392 = pneg %p158
        %p393 = pneg %p155
        %s394 = smul.u32 32, %s23
        %p395 = scmp.lt.s32.totalorder %s394, 63
        %s396 = scalar_select %p395, %s394, 63
        %s397 = smul.addr %s396, 8
        %s398 = scalar_lea.vmem %s4, %s397
        %s399 = smul.u32 32, %s23
        %s400 = smul.u32 2, %s24
        %s401 = smul.u32 32, %s24
        %p402 = scmp.lt.s32.totalorder %s401, 63
        %s403 = scalar_select %p402, %s401, 63
        %s404 = smul.addr %s403, 8
        %s405 = scalar_lea.vmem %s1, %s404
        %s406 = smul.u32 32, %s24
        %s407 = smul.u32 32, %s23
        %p408 = scmp.lt.s32.totalorder %s407, 63
        %s409 = scalar_select %p408, %s407, 63
        %s410 = smul.addr %s409, 8
        %s411 = scalar_lea.vmem %s2, %s410
        %s412 = smul.u32 32, %s23
        %s413 = smul.u32 32, %s23
        %s414 = smul.u32 32, %s23
        %p415 = scmp.lt.s32.totalorder %s414, 63
        %s416 = scalar_select %p415, %s414, 63
        %s417 = smul.addr %s416, 8
        %s418 = scalar_lea.vmem %s4, %s417
        %s419 = smul.u32 32, %s23
        %p420 = scmp.eq.s32.totalorder %s24, 0
        // Predicated region
        $region56: #{lightgcn_forward.6} parent=50 // pred_check
          %p421 = pneg %p420
        $region57: #{lightgcn_forward.6} parent=50 // pred_check_branch
          %423 = sbr.rel (%p421) target = $region59
        $region58: #{lightgcn_forward.6} parent=50 // pred_region
          %424 = vst [vmem:[#allocation2] sm:$0xff] 0.0
          %425 = vst [vmem:[#allocation2 + $0x8] sm:$0xff] 0.0
          %426 = vst [vmem:[#allocation2 + $0x10] sm:$0xff] 0.0
          %427 = vst [vmem:[#allocation2 + $0x18] sm:$0xff] 0.0
          %428 = vst [vmem:[#allocation2 + $0x20] sm:$0xff] 0.0
          %429 = vst [vmem:[#allocation2 + $0x28] sm:$0xff] 0.0
          %430 = vst [vmem:[#allocation2 + $0x30] sm:$0xff] 0.0
          %431 = vst [vmem:[#allocation2 + $0x38] sm:$0xff] 0.0
          %432 = vst [vmem:[#allocation2 + $0x40] sm:$0xff] 0.0
          %433 = vst [vmem:[#allocation2 + $0x48] sm:$0xff] 0.0
          %434 = vst [vmem:[#allocation2 + $0x50] sm:$0xff] 0.0
          %435 = vst [vmem:[#allocation2 + $0x58] sm:$0xff] 0.0
          %436 = vst [vmem:[#allocation2 + $0x60] sm:$0xff] 0.0
          %437 = vst [vmem:[#allocation2 + $0x68] sm:$0xff] 0.0
          %438 = vst [vmem:[#allocation2 + $0x70] sm:$0xff] 0.0
          %439 = vst [vmem:[#allocation2 + $0x78] sm:$0xff] 0.0
          %440 = vst [vmem:[#allocation2 + $0x80] sm:$0xff] 0.0
          %441 = vst [vmem:[#allocation2 + $0x88] sm:$0xff] 0.0
          %442 = vst [vmem:[#allocation2 + $0x90] sm:$0xff] 0.0
          %443 = vst [vmem:[#allocation2 + $0x98] sm:$0xff] 0.0
          %444 = vst [vmem:[#allocation2 + $0xa0] sm:$0xff] 0.0
          %445 = vst [vmem:[#allocation2 + $0xa8] sm:$0xff] 0.0
          %446 = vst [vmem:[#allocation2 + $0xb0] sm:$0xff] 0.0
          %447 = vst [vmem:[#allocation2 + $0xb8] sm:$0xff] 0.0
          %448 = vst [vmem:[#allocation2 + $0xc0] sm:$0xff] 0.0
          %449 = vst [vmem:[#allocation2 + $0xc8] sm:$0xff] 0.0
          %450 = vst [vmem:[#allocation2 + $0xd0] sm:$0xff] 0.0
          %451 = vst [vmem:[#allocation2 + $0xd8] sm:$0xff] 0.0
          %452 = vst [vmem:[#allocation2 + $0xe0] sm:$0xff] 0.0
          %453 = vst [vmem:[#allocation2 + $0xe8] sm:$0xff] 0.0
          %454 = vst [vmem:[#allocation2 + $0xf0] sm:$0xff] 0.0
          %455 = vst [vmem:[#allocation2 + $0xf8] sm:$0xff] 0.0
        $region59: #{lightgcn_forward.6} parent=50 // pred_fallthru
          _
        %v456 = vld [vmem:[#allocation2] sm:$0xff]
        %v457 = vld [vmem:[#allocation2 + $0x8] sm:$0xff]
        %v458 = vld [vmem:[#allocation2 + $0x10] sm:$0xff]
        %v459 = vld [vmem:[#allocation2 + $0x18] sm:$0xff]
        %v460 = vld [vmem:[#allocation2 + $0x20] sm:$0xff]
        %v461 = vld [vmem:[#allocation2 + $0x28] sm:$0xff]
        %v462 = vld [vmem:[#allocation2 + $0x30] sm:$0xff]
        %v463 = vld [vmem:[#allocation2 + $0x38] sm:$0xff]
        %v464 = vld [vmem:[#allocation2 + $0x40] sm:$0xff]
        %v465 = vld [vmem:[#allocation2 + $0x48] sm:$0xff]
        %v466 = vld [vmem:[#allocation2 + $0x50] sm:$0xff]
        %v467 = vld [vmem:[#allocation2 + $0x58] sm:$0xff]
        %v468 = vld [vmem:[#allocation2 + $0x60] sm:$0xff]
        %v469 = vld [vmem:[#allocation2 + $0x68] sm:$0xff]
        %v470 = vld [vmem:[#allocation2 + $0x70] sm:$0xff]
        %v471 = vld [vmem:[#allocation2 + $0x78] sm:$0xff]
        %v472 = vld [vmem:[#allocation2 + $0x80] sm:$0xff]
        %v473 = vld [vmem:[#allocation2 + $0x88] sm:$0xff]
        %v474 = vld [vmem:[#allocation2 + $0x90] sm:$0xff]
        %v475 = vld [vmem:[#allocation2 + $0x98] sm:$0xff]
        %v476 = vld [vmem:[#allocation2 + $0xa0] sm:$0xff]
        %v477 = vld [vmem:[#allocation2 + $0xa8] sm:$0xff]
        %v478 = vld [vmem:[#allocation2 + $0xb0] sm:$0xff]
        %v479 = vld [vmem:[#allocation2 + $0xb8] sm:$0xff]
        %v480 = vld [vmem:[#allocation2 + $0xc0] sm:$0xff]
        %v481 = vld [vmem:[#allocation2 + $0xc8] sm:$0xff]
        %v482 = vld [vmem:[#allocation2 + $0xd0] sm:$0xff]
        %v483 = vld [vmem:[#allocation2 + $0xd8] sm:$0xff]
        %v484 = vld [vmem:[#allocation2 + $0xe0] sm:$0xff]
        %v485 = vld [vmem:[#allocation2 + $0xe8] sm:$0xff]
        %v486 = vld [vmem:[#allocation2 + $0xf0] sm:$0xff]
        %v487 = vld [vmem:[#allocation2 + $0xf8] sm:$0xff]
        %v488 = vld [vmem:[%s361] sm:$0xff]
        %v489 = vld [vmem:[%s361 + $0x8] sm:$0xff]
        %v490 = vld [vmem:[%s361 + $0x10] sm:$0xff]
        %v491 = vld [vmem:[%s361 + $0x18] sm:$0xff]
        %v492 = vld [vmem:[%s361 + $0x20] sm:$0xff]
        %v493 = vld [vmem:[%s361 + $0x28] sm:$0xff]
        %v494 = vld [vmem:[%s361 + $0x30] sm:$0xff]
        %v495 = vld [vmem:[%s361 + $0x38] sm:$0xff]
        %v496 = vld [vmem:[%s361 + $0x40] sm:$0xff]
        %v497 = vld [vmem:[%s361 + $0x48] sm:$0xff]
        %v498 = vld [vmem:[%s361 + $0x50] sm:$0xff]
        %v499 = vld [vmem:[%s361 + $0x58] sm:$0xff]
        %v500 = vld [vmem:[%s361 + $0x60] sm:$0xff]
        %v501 = vld [vmem:[%s361 + $0x68] sm:$0xff]
        %v502 = vld [vmem:[%s361 + $0x70] sm:$0xff]
        %v503 = vld [vmem:[%s361 + $0x78] sm:$0xff]
        %v504 = vld [vmem:[%s361 + $0x80] sm:$0xff]
        %v505 = vld [vmem:[%s361 + $0x88] sm:$0xff]
        %v506 = vld [vmem:[%s361 + $0x90] sm:$0xff]
        %v507 = vld [vmem:[%s361 + $0x98] sm:$0xff]
        %v508 = vld [vmem:[%s361 + $0xa0] sm:$0xff]
        %v509 = vld [vmem:[%s361 + $0xa8] sm:$0xff]
        %v510 = vld [vmem:[%s361 + $0xb0] sm:$0xff]
        %v511 = vld [vmem:[%s361 + $0xb8] sm:$0xff]
        %v512 = vld [vmem:[%s361 + $0xc0] sm:$0xff]
        %v513 = vld [vmem:[%s361 + $0xc8] sm:$0xff]
        %v514 = vld [vmem:[%s361 + $0xd0] sm:$0xff]
        %v515 = vld [vmem:[%s361 + $0xd8] sm:$0xff]
        %v516 = vld [vmem:[%s361 + $0xe0] sm:$0xff]
        %v517 = vld [vmem:[%s361 + $0xe8] sm:$0xff]
        %v518 = vld [vmem:[%s361 + $0xf0] sm:$0xff]
        %v519 = vld [vmem:[%s361 + $0xf8] sm:$0xff]
        %v520 = vld [vmem:[%s361 + $0x100] sm:$0xff]
        %v521 = vld [vmem:[%s361 + $0x108] sm:$0xff]
        %v522 = vld [vmem:[%s361 + $0x110] sm:$0xff]
        %v523 = vld [vmem:[%s361 + $0x118] sm:$0xff]
        %v524 = vld [vmem:[%s361 + $0x120] sm:$0xff]
        %v525 = vld [vmem:[%s361 + $0x128] sm:$0xff]
        %v526 = vld [vmem:[%s361 + $0x130] sm:$0xff]
        %v527 = vld [vmem:[%s361 + $0x138] sm:$0xff]
        %v528 = vld [vmem:[%s361 + $0x140] sm:$0xff]
        %v529 = vld [vmem:[%s361 + $0x148] sm:$0xff]
        %v530 = vld [vmem:[%s361 + $0x150] sm:$0xff]
        %v531 = vld [vmem:[%s361 + $0x158] sm:$0xff]
        %v532 = vld [vmem:[%s361 + $0x160] sm:$0xff]
        %v533 = vld [vmem:[%s361 + $0x168] sm:$0xff]
        %v534 = vld [vmem:[%s361 + $0x170] sm:$0xff]
        %v535 = vld [vmem:[%s361 + $0x178] sm:$0xff]
        %v536 = vld [vmem:[%s361 + $0x180] sm:$0xff]
        %v537 = vld [vmem:[%s361 + $0x188] sm:$0xff]
        %v538 = vld [vmem:[%s361 + $0x190] sm:$0xff]
        %v539 = vld [vmem:[%s361 + $0x198] sm:$0xff]
        %v540 = vld [vmem:[%s361 + $0x1a0] sm:$0xff]
        %v541 = vld [vmem:[%s361 + $0x1a8] sm:$0xff]
        %v542 = vld [vmem:[%s361 + $0x1b0] sm:$0xff]
        %v543 = vld [vmem:[%s361 + $0x1b8] sm:$0xff]
        %v544 = vld [vmem:[%s361 + $0x1c0] sm:$0xff]
        %v545 = vld [vmem:[%s361 + $0x1c8] sm:$0xff]
        %v546 = vld [vmem:[%s361 + $0x1d0] sm:$0xff]
        %v547 = vld [vmem:[%s361 + $0x1d8] sm:$0xff]
        %v548 = vld [vmem:[%s361 + $0x1e0] sm:$0xff]
        %v549 = vld [vmem:[%s361 + $0x1e8] sm:$0xff]
        %v550 = vld [vmem:[%s361 + $0x1f0] sm:$0xff]
        %v551 = vld [vmem:[%s361 + $0x1f8] sm:$0xff]
        %v552 = vld [vmem:[%s405] sm:$0xff]
        %v553 = vld [vmem:[%s405 + $0x8] sm:$0xff]
        %v554 = vld [vmem:[%s405 + $0x10] sm:$0xff]
        %v555 = vld [vmem:[%s405 + $0x18] sm:$0xff]
        %v556 = vld [vmem:[%s405 + $0x20] sm:$0xff]
        %v557 = vld [vmem:[%s405 + $0x28] sm:$0xff]
        %v558 = vld [vmem:[%s405 + $0x30] sm:$0xff]
        %v559 = vld [vmem:[%s405 + $0x38] sm:$0xff]
        %v560 = vld [vmem:[%s405 + $0x40] sm:$0xff]
        %v561 = vld [vmem:[%s405 + $0x48] sm:$0xff]
        %v562 = vld [vmem:[%s405 + $0x50] sm:$0xff]
        %v563 = vld [vmem:[%s405 + $0x58] sm:$0xff]
        %v564 = vld [vmem:[%s405 + $0x60] sm:$0xff]
        %v565 = vld [vmem:[%s405 + $0x68] sm:$0xff]
        %v566 = vld [vmem:[%s405 + $0x70] sm:$0xff]
        %v567 = vld [vmem:[%s405 + $0x78] sm:$0xff]
        %v568 = vld [vmem:[%s405 + $0x80] sm:$0xff]
        %v569 = vld [vmem:[%s405 + $0x88] sm:$0xff]
        %v570 = vld [vmem:[%s405 + $0x90] sm:$0xff]
        %v571 = vld [vmem:[%s405 + $0x98] sm:$0xff]
        %v572 = vld [vmem:[%s405 + $0xa0] sm:$0xff]
        %v573 = vld [vmem:[%s405 + $0xa8] sm:$0xff]
        %v574 = vld [vmem:[%s405 + $0xb0] sm:$0xff]
        %v575 = vld [vmem:[%s405 + $0xb8] sm:$0xff]
        %v576 = vld [vmem:[%s405 + $0xc0] sm:$0xff]
        %v577 = vld [vmem:[%s405 + $0xc8] sm:$0xff]
        %v578 = vld [vmem:[%s405 + $0xd0] sm:$0xff]
        %v579 = vld [vmem:[%s405 + $0xd8] sm:$0xff]
        %v580 = vld [vmem:[%s405 + $0xe0] sm:$0xff]
        %v581 = vld [vmem:[%s405 + $0xe8] sm:$0xff]
        %v582 = vld [vmem:[%s405 + $0xf0] sm:$0xff]
        %v583 = vld [vmem:[%s405 + $0xf8] sm:$0xff]
        %584 = vmatprep.subr.mxu0 0.0
        %585 = vmatpush1.msra.mxu0 %v552
        %586 = vmatprep.subr.mxu0 0.0
        %587 = vmatpush1.msra.mxu0 %v553
        %588 = vmatprep.subr.mxu0 0.0
        %589 = vmatpush1.msra.mxu0 %v554
        %590 = vmatprep.subr.mxu0 0.0
        %591 = vmatpush1.msra.mxu0 %v555
        %592 = vmatprep.subr.mxu0 0.0
        %593 = vmatpush1.msra.mxu0 %v556
        %594 = vmatprep.subr.mxu0 0.0
        %595 = vmatpush1.msra.mxu0 %v557
        %596 = vmatprep.subr.mxu0 0.0
        %597 = vmatpush1.msra.mxu0 %v558
        %598 = vmatprep.subr.mxu0 0.0
        %599 = vmatpush1.msra.mxu0 %v559
        %600 = vmatprep.subr.mxu0 0.0
        %601 = vmatpush1.msra.mxu0 %v560
        %602 = vmatprep.subr.mxu0 0.0
        %603 = vmatpush1.msra.mxu0 %v561
        %604 = vmatprep.subr.mxu0 0.0
        %605 = vmatpush1.msra.mxu0 %v562
        %606 = vmatprep.subr.mxu0 0.0
        %607 = vmatpush1.msra.mxu0 %v563
        %608 = vmatprep.subr.mxu0 0.0
        %609 = vmatpush1.msra.mxu0 %v564
        %610 = vmatprep.subr.mxu0 0.0
        %611 = vmatpush1.msra.mxu0 %v565
        %612 = vmatprep.subr.mxu0 0.0
        %613 = vmatpush1.msra.mxu0 %v566
        %614 = vmatprep.subr.mxu0 0.0
        %615 = vmatpush1.msra.mxu0 %v567
        %616 = vmatprep.subr.mxu0 0.0
        %617 = vmatpush1.msra.mxu0 %v568
        %618 = vmatprep.subr.mxu0 0.0
        %619 = vmatpush1.msra.mxu0 %v569
        %620 = vmatprep.subr.mxu0 0.0
        %621 = vmatpush1.msra.mxu0 %v570
        %622 = vmatprep.subr.mxu0 0.0
        %623 = vmatpush1.msra.mxu0 %v571
        %624 = vmatprep.subr.mxu0 0.0
        %625 = vmatpush1.msra.mxu0 %v572
        %626 = vmatprep.subr.mxu0 0.0
        %627 = vmatpush1.msra.mxu0 %v573
        %628 = vmatprep.subr.mxu0 0.0
        %629 = vmatpush1.msra.mxu0 %v574
        %630 = vmatprep.subr.mxu0 0.0
        %631 = vmatpush1.msra.mxu0 %v575
        %632 = vmatprep.subr.mxu0 0.0
        %633 = vmatpush1.msra.mxu0 %v576
        %634 = vmatprep.subr.mxu0 0.0
        %635 = vmatpush1.msra.mxu0 %v577
        %636 = vmatprep.subr.mxu0 0.0
        %637 = vmatpush1.msra.mxu0 %v578
        %638 = vmatprep.subr.mxu0 0.0
        %639 = vmatpush1.msra.mxu0 %v579
        %640 = vmatprep.subr.mxu0 0.0
        %641 = vmatpush1.msra.mxu0 %v580
        %642 = vmatprep.subr.mxu0 0.0
        %643 = vmatpush1.msra.mxu0 %v581
        %644 = vmatprep.subr.mxu0 0.0
        %645 = vmatpush1.msra.mxu0 %v582
        %646 = vmatprep.subr.mxu0 0.0
        %647 = vmatpush1.msra.mxu0 %v583
        %648 = vmatprep.mubr.f32.mxu0 %v489
        %649 = vmatmul.mubr.f32.gmra.mrb[0].mxu0 %v488
        %v650 = vpop.f32.mrb[0].mxu0
        %v651 = vadd.f32 0.0, %v650
        %v652 = vpop.f32.mrb[0].mxu0
        %653 = vmatprep.mubr.f32.mxu0 %v491
        %654 = vmatmul.mubr.f32.gmra.mrb[0].mxu0 %v490
        %v655 = vpop.f32.mrb[0].mxu0
        %v656 = vadd.f32 0.0, %v655
        %v657 = vpop.f32.mrb[0].mxu0
        %658 = vmatprep.mubr.f32.mxu0 %v493
        %659 = vmatmul.mubr.f32.gmra.mrb[0].mxu0 %v492
        %v660 = vpop.f32.mrb[0].mxu0
        %v661 = vadd.f32 0.0, %v660
        %v662 = vpop.f32.mrb[0].mxu0
        %663 = vmatprep.mubr.f32.mxu0 %v495
        %664 = vmatmul.mubr.f32.gmra.mrb[0].mxu0 %v494
        %v665 = vpop.f32.mrb[0].mxu0
        %v666 = vadd.f32 0.0, %v665
        %v667 = vpop.f32.mrb[0].mxu0
        %668 = vmatprep.mubr.f32.mxu0 %v497
        %669 = vmatmul.mubr.f32.gmra.mrb[0].mxu0 %v496
        %v670 = vpop.f32.mrb[0].mxu0
        %v671 = vadd.f32 0.0, %v670
        %v672 = vpop.f32.mrb[0].mxu0
        %673 = vmatprep.mubr.f32.mxu0 %v499
        %674 = vmatmul.mubr.f32.gmra.mrb[0].mxu0 %v498
        %v675 = vpop.f32.mrb[0].mxu0
        %v676 = vadd.f32 0.0, %v675
        %v677 = vpop.f32.mrb[0].mxu0
        %678 = vmatprep.mubr.f32.mxu0 %v501
        %679 = vmatmul.mubr.f32.gmra.mrb[0].mxu0 %v500
        %v680 = vpop.f32.mrb[0].mxu0
        %v681 = vadd.f32 0.0, %v680
        %v682 = vpop.f32.mrb[0].mxu0
        %683 = vmatprep.mubr.f32.mxu0 %v503
        %684 = vmatmul.mubr.f32.gmra.mrb[0].mxu0 %v502
        %v685 = vpop.f32.mrb[0].mxu0
        %v686 = vadd.f32 0.0, %v685
        %v687 = vpop.f32.mrb[0].mxu0
        %688 = vmatprep.mubr.f32.mxu0 %v505
        %689 = vmatmul.mubr.f32.gmra.mrb[0].mxu0 %v504
        %v690 = vpop.f32.mrb[0].mxu0
        %v691 = vadd.f32 0.0, %v690
        %v692 = vpop.f32.mrb[0].mxu0
        %693 = vmatprep.mubr.f32.mxu0 %v507
        %694 = vmatmul.mubr.f32.gmra.mrb[0].mxu0 %v506
        %v695 = vpop.f32.mrb[0].mxu0
        %v696 = vadd.f32 0.0, %v695
        %v697 = vpop.f32.mrb[0].mxu0
        %698 = vmatprep.mubr.f32.mxu0 %v509
        %699 = vmatmul.mubr.f32.gmra.mrb[0].mxu0 %v508
        %v700 = vpop.f32.mrb[0].mxu0
        %v701 = vadd.f32 0.0, %v700
        %v702 = vpop.f32.mrb[0].mxu0
        %703 = vmatprep.mubr.f32.mxu0 %v511
        %704 = vmatmul.mubr.f32.gmra.mrb[0].mxu0 %v510
        %v705 = vpop.f32.mrb[0].mxu0
        %v706 = vadd.f32 0.0, %v705
        %v707 = vpop.f32.mrb[0].mxu0
        %708 = vmatprep.mubr.f32.mxu0 %v513
        %709 = vmatmul.mubr.f32.gmra.mrb[0].mxu0 %v512
        %v710 = vpop.f32.mrb[0].mxu0
        %v711 = vadd.f32 0.0, %v710
        %v712 = vpop.f32.mrb[0].mxu0
        %713 = vmatprep.mubr.f32.mxu0 %v515
        %714 = vmatmul.mubr.f32.gmra.mrb[0].mxu0 %v514
        %v715 = vpop.f32.mrb[0].mxu0
        %v716 = vadd.f32 0.0, %v715
        %v717 = vpop.f32.mrb[0].mxu0
        %718 = vmatprep.mubr.f32.mxu0 %v517
        %719 = vmatmul.mubr.f32.gmra.mrb[0].mxu0 %v516
        %v720 = vpop.f32.mrb[0].mxu0
        %v721 = vadd.f32 0.0, %v720
        %v722 = vpop.f32.mrb[0].mxu0
        %723 = vmatprep.mubr.f32.mxu0 %v519
        %724 = vmatmul.mubr.f32.gmra.mrb[0].mxu0 %v518
        %v725 = vpop.f32.mrb[0].mxu0
        %v726 = vadd.f32 0.0, %v725
        %v727 = vpop.f32.mrb[0].mxu0
        %728 = vmatprep.mubr.f32.mxu0 %v521
        %729 = vmatmul.mubr.f32.gmra.mrb[0].mxu0 %v520
        %v730 = vpop.f32.mrb[0].mxu0
        %v731 = vadd.f32 0.0, %v730
        %v732 = vpop.f32.mrb[0].mxu0
        %733 = vmatprep.mubr.f32.mxu0 %v523
        %734 = vmatmul.mubr.f32.gmra.mrb[0].mxu0 %v522
        %v735 = vpop.f32.mrb[0].mxu0
        %v736 = vadd.f32 0.0, %v735
        %v737 = vpop.f32.mrb[0].mxu0
        %738 = vmatprep.mubr.f32.mxu0 %v525
        %739 = vmatmul.mubr.f32.gmra.mrb[0].mxu0 %v524
        %v740 = vpop.f32.mrb[0].mxu0
        %v741 = vadd.f32 0.0, %v740
        %v742 = vpop.f32.mrb[0].mxu0
        %743 = vmatprep.mubr.f32.mxu0 %v527
        %744 = vmatmul.mubr.f32.gmra.mrb[0].mxu0 %v526
        %v745 = vpop.f32.mrb[0].mxu0
        %v746 = vadd.f32 0.0, %v745
        %v747 = vpop.f32.mrb[0].mxu0
        %748 = vmatprep.mubr.f32.mxu0 %v529
        %749 = vmatmul.mubr.f32.gmra.mrb[0].mxu0 %v528
        %v750 = vpop.f32.mrb[0].mxu0
        %v751 = vadd.f32 0.0, %v750
        %v752 = vpop.f32.mrb[0].mxu0
        %753 = vmatprep.mubr.f32.mxu0 %v531
        %754 = vmatmul.mubr.f32.gmra.mrb[0].mxu0 %v530
        %v755 = vpop.f32.mrb[0].mxu0
        %v756 = vadd.f32 0.0, %v755
        %v757 = vpop.f32.mrb[0].mxu0
        %758 = vmatprep.mubr.f32.mxu0 %v533
        %759 = vmatmul.mubr.f32.gmra.mrb[0].mxu0 %v532
        %v760 = vpop.f32.mrb[0].mxu0
        %v761 = vadd.f32 0.0, %v760
        %v762 = vpop.f32.mrb[0].mxu0
        %763 = vmatprep.mubr.f32.mxu0 %v535
        %764 = vmatmul.mubr.f32.gmra.mrb[0].mxu0 %v534
        %v765 = vpop.f32.mrb[0].mxu0
        %v766 = vadd.f32 0.0, %v765
        %v767 = vpop.f32.mrb[0].mxu0
        %768 = vmatprep.mubr.f32.mxu0 %v537
        %769 = vmatmul.mubr.f32.gmra.mrb[0].mxu0 %v536
        %v770 = vpop.f32.mrb[0].mxu0
        %v771 = vadd.f32 0.0, %v770
        %v772 = vpop.f32.mrb[0].mxu0
        %773 = vmatprep.mubr.f32.mxu0 %v539
        %774 = vmatmul.mubr.f32.gmra.mrb[0].mxu0 %v538
        %v775 = vpop.f32.mrb[0].mxu0
        %v776 = vadd.f32 0.0, %v775
        %v777 = vpop.f32.mrb[0].mxu0
        %778 = vmatprep.mubr.f32.mxu0 %v541
        %779 = vmatmul.mubr.f32.gmra.mrb[0].mxu0 %v540
        %v780 = vpop.f32.mrb[0].mxu0
        %v781 = vadd.f32 0.0, %v780
        %v782 = vpop.f32.mrb[0].mxu0
        %783 = vmatprep.mubr.f32.mxu0 %v543
        %784 = vmatmul.mubr.f32.gmra.mrb[0].mxu0 %v542
        %v785 = vpop.f32.mrb[0].mxu0
        %v786 = vadd.f32 0.0, %v785
        %v787 = vpop.f32.mrb[0].mxu0
        %788 = vmatprep.mubr.f32.mxu0 %v545
        %789 = vmatmul.mubr.f32.gmra.mrb[0].mxu0 %v544
        %v790 = vpop.f32.mrb[0].mxu0
        %v791 = vadd.f32 0.0, %v790
        %v792 = vpop.f32.mrb[0].mxu0
        %793 = vmatprep.mubr.f32.mxu0 %v547
        %794 = vmatmul.mubr.f32.gmra.mrb[0].mxu0 %v546
        %v795 = vpop.f32.mrb[0].mxu0
        %v796 = vadd.f32 0.0, %v795
        %v797 = vpop.f32.mrb[0].mxu0
        %798 = vmatprep.mubr.f32.mxu0 %v549
        %799 = vmatmul.mubr.f32.gmra.mrb[0].mxu0 %v548
        %v800 = vpop.f32.mrb[0].mxu0
        %v801 = vadd.f32 0.0, %v800
        %v802 = vpop.f32.mrb[0].mxu0
        %803 = vmatprep.mubr.f32.mxu0 %v551
        %804 = vmatmul.mubr.f32.gmra.mrb[0].mxu0 %v550
        %v805 = vpop.f32.mrb[0].mxu0
        %v806 = vadd.f32 0.0, %v805
        %v807 = vpop.f32.mrb[0].mxu0
        %808 = vdwg.mxu0
        %v809 = vadd.f32 %v456, %v651
        %v810 = vadd.f32 %v457, %v656
        %v811 = vadd.f32 %v458, %v661
        %v812 = vadd.f32 %v459, %v666
        %v813 = vadd.f32 %v460, %v671
        %v814 = vadd.f32 %v461, %v676
        %v815 = vadd.f32 %v462, %v681
        %v816 = vadd.f32 %v463, %v686
        %v817 = vadd.f32 %v464, %v691
        %v818 = vadd.f32 %v465, %v696
        %v819 = vadd.f32 %v466, %v701
        %v820 = vadd.f32 %v467, %v706
        %v821 = vadd.f32 %v468, %v711
        %v822 = vadd.f32 %v469, %v716
        %v823 = vadd.f32 %v470, %v721
        %v824 = vadd.f32 %v471, %v726
        %v825 = vadd.f32 %v472, %v731
        %v826 = vadd.f32 %v473, %v736
        %v827 = vadd.f32 %v474, %v741
        %v828 = vadd.f32 %v475, %v746
        %v829 = vadd.f32 %v476, %v751
        %v830 = vadd.f32 %v477, %v756
        %v831 = vadd.f32 %v478, %v761
        %v832 = vadd.f32 %v479, %v766
        %v833 = vadd.f32 %v480, %v771
        %v834 = vadd.f32 %v481, %v776
        %v835 = vadd.f32 %v482, %v781
        %v836 = vadd.f32 %v483, %v786
        %v837 = vadd.f32 %v484, %v791
        %v838 = vadd.f32 %v485, %v796
        %v839 = vadd.f32 %v486, %v801
        %v840 = vadd.f32 %v487, %v806
        %841 = vst [vmem:[#allocation2] sm:$0xff] %v809
        %842 = vst [vmem:[#allocation2 + $0x8] sm:$0xff] %v810
        %843 = vst [vmem:[#allocation2 + $0x10] sm:$0xff] %v811
        %844 = vst [vmem:[#allocation2 + $0x18] sm:$0xff] %v812
        %845 = vst [vmem:[#allocation2 + $0x20] sm:$0xff] %v813
        %846 = vst [vmem:[#allocation2 + $0x28] sm:$0xff] %v814
        %847 = vst [vmem:[#allocation2 + $0x30] sm:$0xff] %v815
        %848 = vst [vmem:[#allocation2 + $0x38] sm:$0xff] %v816
        %849 = vst [vmem:[#allocation2 + $0x40] sm:$0xff] %v817
        %850 = vst [vmem:[#allocation2 + $0x48] sm:$0xff] %v818
        %851 = vst [vmem:[#allocation2 + $0x50] sm:$0xff] %v819
        %852 = vst [vmem:[#allocation2 + $0x58] sm:$0xff] %v820
        %853 = vst [vmem:[#allocation2 + $0x60] sm:$0xff] %v821
        %854 = vst [vmem:[#allocation2 + $0x68] sm:$0xff] %v822
        %855 = vst [vmem:[#allocation2 + $0x70] sm:$0xff] %v823
        %856 = vst [vmem:[#allocation2 + $0x78] sm:$0xff] %v824
        %857 = vst [vmem:[#allocation2 + $0x80] sm:$0xff] %v825
        %858 = vst [vmem:[#allocation2 + $0x88] sm:$0xff] %v826
        %859 = vst [vmem:[#allocation2 + $0x90] sm:$0xff] %v827
        %860 = vst [vmem:[#allocation2 + $0x98] sm:$0xff] %v828
        %861 = vst [vmem:[#allocation2 + $0xa0] sm:$0xff] %v829
        %862 = vst [vmem:[#allocation2 + $0xa8] sm:$0xff] %v830
        %863 = vst [vmem:[#allocation2 + $0xb0] sm:$0xff] %v831
        %864 = vst [vmem:[#allocation2 + $0xb8] sm:$0xff] %v832
        %865 = vst [vmem:[#allocation2 + $0xc0] sm:$0xff] %v833
        %866 = vst [vmem:[#allocation2 + $0xc8] sm:$0xff] %v834
        %867 = vst [vmem:[#allocation2 + $0xd0] sm:$0xff] %v835
        %868 = vst [vmem:[#allocation2 + $0xd8] sm:$0xff] %v836
        %869 = vst [vmem:[#allocation2 + $0xe0] sm:$0xff] %v837
        %870 = vst [vmem:[#allocation2 + $0xe8] sm:$0xff] %v838
        %871 = vst [vmem:[#allocation2 + $0xf0] sm:$0xff] %v839
        %872 = vst [vmem:[#allocation2 + $0xf8] sm:$0xff] %v840
        %p873 = scmp.eq.s32.totalorder %s24, 1
        // Predicated region
        $region60: #{lightgcn_forward.6} parent=50 // pred_check
          %p874 = pneg %p873
        $region61: #{lightgcn_forward.6} parent=50 // pred_check_branch
          %876 = sbr.rel (%p874) target = $region63
        $region62: #{lightgcn_forward.6} parent=50 // pred_region
          %v877 = vld [vmem:[#allocation2] sm:$0xff]
          %v878 = vld [vmem:[#allocation2 + $0x8] sm:$0xff]
          %v879 = vld [vmem:[#allocation2 + $0x10] sm:$0xff]
          %v880 = vld [vmem:[#allocation2 + $0x18] sm:$0xff]
          %v881 = vld [vmem:[#allocation2 + $0x20] sm:$0xff]
          %v882 = vld [vmem:[#allocation2 + $0x28] sm:$0xff]
          %v883 = vld [vmem:[#allocation2 + $0x30] sm:$0xff]
          %v884 = vld [vmem:[#allocation2 + $0x38] sm:$0xff]
          %v885 = vld [vmem:[#allocation2 + $0x40] sm:$0xff]
          %v886 = vld [vmem:[#allocation2 + $0x48] sm:$0xff]
          %v887 = vld [vmem:[#allocation2 + $0x50] sm:$0xff]
          %v888 = vld [vmem:[#allocation2 + $0x58] sm:$0xff]
          %v889 = vld [vmem:[#allocation2 + $0x60] sm:$0xff]
          %v890 = vld [vmem:[#allocation2 + $0x68] sm:$0xff]
          %v891 = vld [vmem:[#allocation2 + $0x70] sm:$0xff]
          %v892 = vld [vmem:[#allocation2 + $0x78] sm:$0xff]
          %v893 = vld [vmem:[#allocation2 + $0x80] sm:$0xff]
          %v894 = vld [vmem:[#allocation2 + $0x88] sm:$0xff]
          %v895 = vld [vmem:[#allocation2 + $0x90] sm:$0xff]
          %v896 = vld [vmem:[#allocation2 + $0x98] sm:$0xff]
          %v897 = vld [vmem:[#allocation2 + $0xa0] sm:$0xff]
          %v898 = vld [vmem:[#allocation2 + $0xa8] sm:$0xff]
          %v899 = vld [vmem:[#allocation2 + $0xb0] sm:$0xff]
          %v900 = vld [vmem:[#allocation2 + $0xb8] sm:$0xff]
          %v901 = vld [vmem:[#allocation2 + $0xc0] sm:$0xff]
          %v902 = vld [vmem:[#allocation2 + $0xc8] sm:$0xff]
          %v903 = vld [vmem:[#allocation2 + $0xd0] sm:$0xff]
          %v904 = vld [vmem:[#allocation2 + $0xd8] sm:$0xff]
          %v905 = vld [vmem:[#allocation2 + $0xe0] sm:$0xff]
          %v906 = vld [vmem:[#allocation2 + $0xe8] sm:$0xff]
          %v907 = vld [vmem:[#allocation2 + $0xf0] sm:$0xff]
          %v908 = vld [vmem:[#allocation2 + $0xf8] sm:$0xff]
          %909 = vst [vmem:[%s391] sm:$0xff] %v877
          %910 = vst [vmem:[%s391 + $0x8] sm:$0xff] %v878
          %911 = vst [vmem:[%s391 + $0x10] sm:$0xff] %v879
          %912 = vst [vmem:[%s391 + $0x18] sm:$0xff] %v880
          %913 = vst [vmem:[%s391 + $0x20] sm:$0xff] %v881
          %914 = vst [vmem:[%s391 + $0x28] sm:$0xff] %v882
          %915 = vst [vmem:[%s391 + $0x30] sm:$0xff] %v883
          %916 = vst [vmem:[%s391 + $0x38] sm:$0xff] %v884
          %917 = vst [vmem:[%s391 + $0x40] sm:$0xff] %v885
          %918 = vst [vmem:[%s391 + $0x48] sm:$0xff] %v886
          %919 = vst [vmem:[%s391 + $0x50] sm:$0xff] %v887
          %920 = vst [vmem:[%s391 + $0x58] sm:$0xff] %v888
          %921 = vst [vmem:[%s391 + $0x60] sm:$0xff] %v889
          %922 = vst [vmem:[%s391 + $0x68] sm:$0xff] %v890
          %923 = vst [vmem:[%s391 + $0x70] sm:$0xff] %v891
          %924 = vst [vmem:[%s391 + $0x78] sm:$0xff] %v892
          %925 = vst [vmem:[%s391 + $0x80] sm:$0xff] %v893
          %926 = vst [vmem:[%s391 + $0x88] sm:$0xff] %v894
          %927 = vst [vmem:[%s391 + $0x90] sm:$0xff] %v895
          %928 = vst [vmem:[%s391 + $0x98] sm:$0xff] %v896
          %929 = vst [vmem:[%s391 + $0xa0] sm:$0xff] %v897
          %930 = vst [vmem:[%s391 + $0xa8] sm:$0xff] %v898
          %931 = vst [vmem:[%s391 + $0xb0] sm:$0xff] %v899
          %932 = vst [vmem:[%s391 + $0xb8] sm:$0xff] %v900
          %933 = vst [vmem:[%s391 + $0xc0] sm:$0xff] %v901
          %934 = vst [vmem:[%s391 + $0xc8] sm:$0xff] %v902
          %935 = vst [vmem:[%s391 + $0xd0] sm:$0xff] %v903
          %936 = vst [vmem:[%s391 + $0xd8] sm:$0xff] %v904
          %937 = vst [vmem:[%s391 + $0xe0] sm:$0xff] %v905
          %938 = vst [vmem:[%s391 + $0xe8] sm:$0xff] %v906
          %939 = vst [vmem:[%s391 + $0xf0] sm:$0xff] %v907
          %940 = vst [vmem:[%s391 + $0xf8] sm:$0xff] %v908
          %v941 = vld [vmem:[%s411] sm:$0xff]
          %v942 = vld [vmem:[%s411 + $0x8] sm:$0xff]
          %v943 = vld [vmem:[%s411 + $0x10] sm:$0xff]
          %v944 = vld [vmem:[%s411 + $0x18] sm:$0xff]
          %v945 = vld [vmem:[%s411 + $0x20] sm:$0xff]
          %v946 = vld [vmem:[%s411 + $0x28] sm:$0xff]
          %v947 = vld [vmem:[%s411 + $0x30] sm:$0xff]
          %v948 = vld [vmem:[%s411 + $0x38] sm:$0xff]
          %v949 = vld [vmem:[%s411 + $0x40] sm:$0xff]
          %v950 = vld [vmem:[%s411 + $0x48] sm:$0xff]
          %v951 = vld [vmem:[%s411 + $0x50] sm:$0xff]
          %v952 = vld [vmem:[%s411 + $0x58] sm:$0xff]
          %v953 = vld [vmem:[%s411 + $0x60] sm:$0xff]
          %v954 = vld [vmem:[%s411 + $0x68] sm:$0xff]
          %v955 = vld [vmem:[%s411 + $0x70] sm:$0xff]
          %v956 = vld [vmem:[%s411 + $0x78] sm:$0xff]
          %v957 = vld [vmem:[%s411 + $0x80] sm:$0xff]
          %v958 = vld [vmem:[%s411 + $0x88] sm:$0xff]
          %v959 = vld [vmem:[%s411 + $0x90] sm:$0xff]
          %v960 = vld [vmem:[%s411 + $0x98] sm:$0xff]
          %v961 = vld [vmem:[%s411 + $0xa0] sm:$0xff]
          %v962 = vld [vmem:[%s411 + $0xa8] sm:$0xff]
          %v963 = vld [vmem:[%s411 + $0xb0] sm:$0xff]
          %v964 = vld [vmem:[%s411 + $0xb8] sm:$0xff]
          %v965 = vld [vmem:[%s411 + $0xc0] sm:$0xff]
          %v966 = vld [vmem:[%s411 + $0xc8] sm:$0xff]
          %v967 = vld [vmem:[%s411 + $0xd0] sm:$0xff]
          %v968 = vld [vmem:[%s411 + $0xd8] sm:$0xff]
          %v969 = vld [vmem:[%s411 + $0xe0] sm:$0xff]
          %v970 = vld [vmem:[%s411 + $0xe8] sm:$0xff]
          %v971 = vld [vmem:[%s411 + $0xf0] sm:$0xff]
          %v972 = vld [vmem:[%s411 + $0xf8] sm:$0xff]
          %v973 = vadd.f32 %v941, %v877
          %v974 = vadd.f32 %v942, %v878
          %v975 = vadd.f32 %v943, %v879
          %v976 = vadd.f32 %v944, %v880
          %v977 = vadd.f32 %v945, %v881
          %v978 = vadd.f32 %v946, %v882
          %v979 = vadd.f32 %v947, %v883
          %v980 = vadd.f32 %v948, %v884
          %v981 = vadd.f32 %v949, %v885
          %v982 = vadd.f32 %v950, %v886
          %v983 = vadd.f32 %v951, %v887
          %v984 = vadd.f32 %v952, %v888
          %v985 = vadd.f32 %v953, %v889
          %v986 = vadd.f32 %v954, %v890
          %v987 = vadd.f32 %v955, %v891
          %v988 = vadd.f32 %v956, %v892
          %v989 = vadd.f32 %v957, %v893
          %v990 = vadd.f32 %v958, %v894
          %v991 = vadd.f32 %v959, %v895
          %v992 = vadd.f32 %v960, %v896
          %v993 = vadd.f32 %v961, %v897
          %v994 = vadd.f32 %v962, %v898
          %v995 = vadd.f32 %v963, %v899
          %v996 = vadd.f32 %v964, %v900
          %v997 = vadd.f32 %v965, %v901
          %v998 = vadd.f32 %v966, %v902
          %v999 = vadd.f32 %v967, %v903
          %v1000 = vadd.f32 %v968, %v904
          %v1001 = vadd.f32 %v969, %v905
          %v1002 = vadd.f32 %v970, %v906
          %v1003 = vadd.f32 %v971, %v907
          %v1004 = vadd.f32 %v972, %v908
          %1005 = vst [vmem:[%s418] sm:$0xff] %v973
          %1006 = vst [vmem:[%s418 + $0x8] sm:$0xff] %v974
          %1007 = vst [vmem:[%s418 + $0x10] sm:$0xff] %v975
          %1008 = vst [vmem:[%s418 + $0x18] sm:$0xff] %v976
          %1009 = vst [vmem:[%s418 + $0x20] sm:$0xff] %v977
          %1010 = vst [vmem:[%s418 + $0x28] sm:$0xff] %v978
          %1011 = vst [vmem:[%s418 + $0x30] sm:$0xff] %v979
          %1012 = vst [vmem:[%s418 + $0x38] sm:$0xff] %v980
          %1013 = vst [vmem:[%s418 + $0x40] sm:$0xff] %v981
          %1014 = vst [vmem:[%s418 + $0x48] sm:$0xff] %v982
          %1015 = vst [vmem:[%s418 + $0x50] sm:$0xff] %v983
          %1016 = vst [vmem:[%s418 + $0x58] sm:$0xff] %v984
          %1017 = vst [vmem:[%s418 + $0x60] sm:$0xff] %v985
          %1018 = vst [vmem:[%s418 + $0x68] sm:$0xff] %v986
          %1019 = vst [vmem:[%s418 + $0x70] sm:$0xff] %v987
          %1020 = vst [vmem:[%s418 + $0x78] sm:$0xff] %v988
          %1021 = vst [vmem:[%s418 + $0x80] sm:$0xff] %v989
          %1022 = vst [vmem:[%s418 + $0x88] sm:$0xff] %v990
          %1023 = vst [vmem:[%s418 + $0x90] sm:$0xff] %v991
          %1024 = vst [vmem:[%s418 + $0x98] sm:$0xff] %v992
          %1025 = vst [vmem:[%s418 + $0xa0] sm:$0xff] %v993
          %1026 = vst [vmem:[%s418 + $0xa8] sm:$0xff] %v994
          %1027 = vst [vmem:[%s418 + $0xb0] sm:$0xff] %v995
          %1028 = vst [vmem:[%s418 + $0xb8] sm:$0xff] %v996
          %1029 = vst [vmem:[%s418 + $0xc0] sm:$0xff] %v997
          %1030 = vst [vmem:[%s418 + $0xc8] sm:$0xff] %v998
          %1031 = vst [vmem:[%s418 + $0xd0] sm:$0xff] %v999
          %1032 = vst [vmem:[%s418 + $0xd8] sm:$0xff] %v1000
          %1033 = vst [vmem:[%s418 + $0xe0] sm:$0xff] %v1001
          %1034 = vst [vmem:[%s418 + $0xe8] sm:$0xff] %v1002
          %1035 = vst [vmem:[%s418 + $0xf0] sm:$0xff] %v1003
          %1036 = vst [vmem:[%s418 + $0xf8] sm:$0xff] %v1004
        $region63: #{lightgcn_forward.6} parent=50 // pred_fallthru
          _
        %s1037 = sand.u32 %s119, 1
        %s1038 = scalar_lea.sflag [#allocation5], %s1037
        %s1039 = sand.u32 %s119, 1
        %s1040 = smul.addr %s1039, 256
        %s1041 = scalar_lea.vmem [#allocation4], %s1040
        %s1042 = smul.u32 32, %s23
        %p1043 = scmp.lt.s32.totalorder %s1042, 63
        %s1044 = scalar_select %p1043, %s1042, 63
        %s1045 = smul.addr %s1044, 8
        %s1046 = scalar_lea.vmem %s4, %s1045
        // Predicated region
        $region64: #{lightgcn_forward.6} parent=50 // pred_check
          %p1047 = pneg %p129
        $region65: #{lightgcn_forward.6} parent=50 // pred_check_branch
          %1049 = sbr.rel (%p1047) target = $region67
        $region66: #{lightgcn_forward.6} parent=50 // pred_region
          %s1050 = smul.u32 32, %s23
          %s1052 = ssub.s32 4096, 4096
          %1053 = vsyncadd %s1038, %s1052
          %s1054 = smul.addr %s1050, 128
          %s1055 = scalar_lea.hbm %s3, %s1054
          %s1056 = sshll.u32 %s1041, 4
          %s1057 = int_to_ptr.vmem [resolvable:$true] %s1056
          %1062 = dma.vmem_to_hbm [thread:$0]  %s1057, 4096, %s1055, %s1038, 128, 128, 8
        $region67: #{lightgcn_forward.6} parent=50 // pred_fallthru
          _
        // Predicated region
        $region68: #{lightgcn_forward.6} parent=50 // pred_check
          %p1063 = pneg %p155
        $region69: #{lightgcn_forward.6} parent=50 // pred_check_branch
          %1065 = sbr.rel (%p1063) target = $region71
        $region70: #{lightgcn_forward.6} parent=50 // pred_region
          %s1066 = smul.u32 32, %s23
        $region71: #{lightgcn_forward.6} parent=50 // pred_fallthru
          _
      $region51: #{lightgcn_forward.6} parent=5 // pred_fallthru
        _
      %p1067 = scmp.le.s32.totalorder 2, %s14
      // Predicated region
      $region72: #{lightgcn_forward.6} parent=5 // pred_check
        %p1068 = pneg %p1067
      $region73: #{lightgcn_forward.6} parent=5 // pred_check_branch
        %1070 = sbr.rel (%p1068) target = $region75
      $region74: #{lightgcn_forward.6} parent=5 // pred_region
        %s1071 = ssub.s32 %s14, 2
        // Predicated region
        $region76: #{lightgcn_forward.6} parent=74 // pred_check
          %p1072 = pneg %p135
        $region77: #{lightgcn_forward.6} parent=74 // pred_check_branch
          %1074 = sbr.rel (%p1072) target = $region79
        $region78: #{lightgcn_forward.6} parent=74 // pred_region
          %s1075 = sand.u32 %s120, 1
          %s1076 = scalar_lea.sflag [#allocation5], %s1075
          %s1077 = sand.u32 %s120, 1
          %s1078 = smul.addr %s1077, 256
          %s1079 = scalar_lea.vmem [#allocation4], %s1078
          %1080 = dma.done %s1076, 4096
        $region79: #{lightgcn_forward.6} parent=74 // pred_fallthru
          _
        // Predicated region
        $region80: #{lightgcn_forward.6} parent=74 // pred_check
          %p1081 = pneg %p161
        $region81: #{lightgcn_forward.6} parent=74 // pred_check_branch
          %1083 = sbr.rel (%p1081) target = $region83
        $region82: #{lightgcn_forward.6} parent=74 // pred_region
          %s1084 = smul.u32 32, %s25
          %p1085 = scmp.lt.s32.totalorder %s1084, 63
          %s1086 = scalar_select %p1085, %s1084, 63
          %s1087 = smul.addr %s1086, 8
          %s1088 = scalar_lea.vmem %s4, %s1087
        $region83: #{lightgcn_forward.6} parent=74 // pred_fallthru
          _
      $region75: #{lightgcn_forward.6} parent=5 // pred_fallthru
        _
    $region6: #{lightgcn_forward.6} parent=1 // loop_footer
      %s18 = sadd.s32 1, %s14
    $region7: #{lightgcn_forward.6} parent=1 // loop_footer_branch
      %13 = sbr.rel target = $region3
    $region8: #{lightgcn_forward.6} parent=1 // loop_exit
      _
    %1089 = vsyncpa [#allocation5], 1
    %s1090 = scalar_lea.sflag [#allocation5], 1
    %1091 = vsyncpa %s1090, 1

</llo_original>
